<compile_context>
chip_gen: v6e
topology: v6e:2x2x1
jax: 0.10.0
libtpu: 0.0.40
codegen_flags: <defaults>
</compile_context>

<pallas_src>
import functools

import jax
import jax.numpy as jnp
from jax.experimental import pallas as pl
from jax.experimental.pallas import tpu as pltpu


def _round_up(x, m):
    return ((x + m - 1) // m) * m


def _pad2d(a, rows, cols):
    r, c = a.shape
    if r == rows and c == cols:
        return a
    return jnp.pad(a, ((0, rows - r), (0, cols - c)))


def _default_epilogue_dtype():
    # v6e/v7x have bf16 VPU/EUP -> bf16 epilogue halves VPU/EUP work and
    # removes the per-layer cast before each dot.  v5e (and older) do not ->
    # keep the f32 epilogue there.
    try:
        kind = jax.devices()[0].device_kind.lower()
    except Exception:
        kind = ""
    return jnp.bfloat16 if ("v6" in kind or "v7" in kind) else jnp.float32


def _vmem_capacity_bytes():
    try:
        return int(pltpu.get_tpu_info().vmem_capacity_bytes)
    except Exception:
        return 64 * 1024 * 1024  # v7x-safe lower bound


# ----------------------------------------------------------------------------
# Fused kernel: one row-tile through the entire MLP
# ----------------------------------------------------------------------------
def _mlp_fused_kernel(*refs, num_hidden_layers, layernorm_flags, true_dims,
                      eps, epilogue_dtype):
    """refs = (x_ref, <per hidden layer: w, b[, gamma, beta]>, w_f, b_f, out_ref).

    Matmuls run on the MXU in the weights' storage dtype (bf16) with f32
    accumulation.  LayerNorm statistics are f32; the affine output + SiLU run
    in `epilogue_dtype` (bf16 on v6e/v7x, f32 on v5e).  Feature dims may be
    zero-padded to 128; `true_dims` carries the real hidden width per layer so
    LN statistics divide by the correct count (padded lanes are exactly 0).
    """
    x_ref, out_ref = refs[0], refs[-1]
    prefs = refs[1:-1]

    h = x_ref[...]  # single cast to the weight dtype happens at the first dot
    idx = 0
    for li in range(num_hidden_layers):
        w_ref, b_ref = prefs[idx], prefs[idx + 1]
        idx += 2
        w = w_ref[...]
        h = jnp.dot(h.astype(w.dtype), w, preferred_element_type=jnp.float32)
        h = h + b_ref[...].astype(jnp.float32)
        if layernorm_flags[li]:
            g_ref, be_ref = prefs[idx], prefs[idx + 1]
            idx += 2
            d_true = true_dims[li]
            d_pad = h.shape[-1]
            inv_d = 1.0 / float(d_true)
            # Padded output lanes are exactly 0 (zero weight cols / zero bias),
            # so the full-lane sum equals the sum over the true lanes.
            mean = jnp.sum(h, axis=-1, keepdims=True) * inv_d
            centered = h - mean
            if d_pad != d_true:
                lane = jax.lax.broadcasted_iota(jnp.int32, h.shape, 1)
                centered = jnp.where(lane < d_true, centered, 0.0)
            var = jnp.sum(centered * centered, axis=-1, keepdims=True) * inv_d
            h = centered * jax.lax.rsqrt(var + eps)
            # gamma/beta are zero-padded -> padded lanes return to exactly 0.
            h = h * g_ref[...].astype(jnp.float32) + be_ref[...].astype(jnp.float32)
        h = h.astype(epilogue_dtype)
        h = h * jax.nn.sigmoid(h)  # SiLU
        # TODO(synk): activations other than 'silu' and dropout>0 not implemented.

    # Final Linear (no norm / activation).
    w_ref, b_ref = prefs[idx], prefs[idx + 1]
    w = w_ref[...]
    y = jnp.dot(h.astype(w.dtype), w, preferred_element_type=jnp.float32)
    y = y + b_ref[...].astype(jnp.float32)
    out_ref[...] = y.astype(out_ref.dtype)


# ----------------------------------------------------------------------------
# pallas_call wrapper: single fused call, lane-padded, row-tiled grid
# ----------------------------------------------------------------------------
def mlp_forward(x, params, *, eps=1e-5, block_rows=512, out_dtype=jnp.float32,
                epilogue_dtype=None, activation="silu", dropout=0.0):
    """x: [N, input_dim] -> [N, output_dim]."""
    assert activation == "silu", "TODO(synk): only 'silu' activation implemented"
    assert dropout == 0.0, "TODO(synk): dropout > 0 not implemented"
    if epilogue_dtype is None:
        epilogue_dtype = _default_epilogue_dtype()

    n, input_dim = x.shape
    num_hidden = len(params) - 1
    output_dim = params[-1]["w"].shape[1]
    layernorm_flags = tuple(p.get("gamma") is not None for p in params[:-1])
    hidden_true_dims = tuple(p["w"].shape[1] for p in params[:-1])

    # ---- Pad all feature dims to 128-lane multiples (lane-dense MXU/vst) ----
    pin = _round_up(input_dim, 128)
    pout = _round_up(output_dim, 128)
    padded_params = []
    last_p = pin
    for li, layer in enumerate(params[:-1]):
        pd = _round_up(layer["w"].shape[1], 128)
        lp = {"w": _pad2d(layer["w"], last_p, pd), "b": _pad2d(layer["b"], 1, pd)}
        if layernorm_flags[li]:
            lp["gamma"] = _pad2d(layer["gamma"], 1, pd)  # zero-padded
            lp["beta"] = _pad2d(layer["beta"], 1, pd)    # zero-padded
        padded_params.append(lp)
        last_p = pd
    padded_params.append({"w": _pad2d(params[-1]["w"], last_p, pout),
                          "b": _pad2d(params[-1]["b"], 1, pout)})

    # ---- Row tile: multiple of 8, large by default, >= 2 tiles when possible.
    n8 = _round_up(n, 8)
    tile_m = min(_round_up(block_rows, 8), n8)
    if pl.cdiv(n8, tile_m) < 2 and n8 >= 16:
        # Keep both TensorCores busy on v7x (harmless elsewhere).
        tile_m = _round_up(pl.cdiv(n8, 2), 8)
    padded_n = _round_up(n, tile_m)
    grid = (padded_n // tile_m,)

    # Zero-pad rows and input features (padded rows/lanes are benign).
    x_p = jnp.pad(x, ((0, padded_n - n), (0, pin - input_dim)))

    # Flat parameter list in the kernel's unpacking order.
    flat_params = []
    for li, lp in enumerate(padded_params[:-1]):
        flat_params += [lp["w"], lp["b"]]
        if layernorm_flags[li]:
            flat_params += [lp["gamma"], lp["beta"]]
    flat_params += [padded_params[-1]["w"], padded_params[-1]["b"]]

    param_bytes = sum(int(a.size) * a.dtype.itemsize for a in flat_params)
    max_feat = max([pin, pout] + [lp["w"].shape[1] for lp in padded_params[:-1]])
    vmem_cap = _vmem_capacity_bytes()
    # TODO(synk): when param_bytes exceeds ~0.4 * vmem_cap (large hidden_dim,
    # esp. on v7x's 64 MiB), switch to a weight-streaming path: tile K/N per
    # layer with pltpu.emit_pipeline + an f32 VMEM accumulator instead of
    # keeping full [D_in, D_out] matrices resident.  Unnecessary at these sizes.

    kernel = functools.partial(
        _mlp_fused_kernel,
        num_hidden_layers=num_hidden,
        layernorm_flags=layernorm_flags,
        true_dims=hidden_true_dims,
        eps=eps,
        epilogue_dtype=epilogue_dtype,
    )

    flops = sum(2 * padded_n * lp["w"].shape[0] * lp["w"].shape[1]
                for lp in padded_params)
    transcendentals = padded_n * sum(lp["w"].shape[1] for lp in padded_params[:-1])
    bytes_accessed = (int(x_p.size) * x_p.dtype.itemsize
                      + padded_n * pout * jnp.dtype(out_dtype).itemsize
                      + param_bytes)
    cost = pl.CostEstimate(flops=int(flops), transcendentals=int(transcendentals),
                           bytes_accessed=int(bytes_accessed))

    def build(single_buffer_params):
        spec_kwargs = ({"pipeline_mode": pl.Buffered(1)}
                       if single_buffer_params else {})

        def resident_spec(shape):
            # Constant index_map -> stays VMEM-resident across all row tiles;
            # single-buffered when supported (double buffering an unchanging
            # block only wastes VMEM).
            return pl.BlockSpec(shape, lambda i: (0,) * len(shape), **spec_kwargs)

        in_specs = [pl.BlockSpec((tile_m, pin), lambda i: (i, 0))]
        in_specs += [resident_spec(a.shape) for a in flat_params]

        # VMEM budget: double-buffered x/out row tiles + resident params
        # (x1 or x2) + f32 working activations; cap at 85% of physical VMEM.
        param_mult = 1 if single_buffer_params else 2
        tile_io = 2 * tile_m * (pin * x_p.dtype.itemsize
                                + pout * jnp.dtype(out_dtype).itemsize)
        work = 2 * tile_m * max_feat * 4
        vmem_est = tile_io + work + param_mult * param_bytes
        vmem_limit = int(min(max(int(1.5 * vmem_est), 8 * 1024 * 1024),
                             int(0.85 * vmem_cap)))

        return pl.pallas_call(
            kernel,
            out_shape=jax.ShapeDtypeStruct((padded_n, pout), out_dtype),
            grid_spec=pltpu.PrefetchScalarGridSpec(
                num_scalar_prefetch=0,
                grid=grid,
                in_specs=in_specs,
                out_specs=pl.BlockSpec((tile_m, pout), lambda i: (i, 0)),
            ),
            compiler_params=pltpu.CompilerParams(
                dimension_semantics=("parallel",),
                vmem_limit_bytes=vmem_limit,
            ),
            cost_estimate=cost,
        )

    try:
        out_p = build(single_buffer_params=True)(x_p, *flat_params)
    except Exception:
        # This jax/Mosaic version rejected pl.Buffered(1): fall back to the
        # default double-buffered resident params (correct, just more VMEM).
        out_p = build(single_buffer_params=False)(x_p, *flat_params)

    return out_p[:n, :output_dim]


# ----------------------------------------------------------------------------
# Parameter init (PyTorch-like uniform +/- 1/sqrt(fan_in); weights in bf16)
# ----------------------------------------------------------------------------
def init_mlp_params(key, input_dim, hidden_dim, output_dim, num_hidden_layers,
                    layernorm_switch=True, weight_dtype=jnp.bfloat16):
    params = []
    last_dim = input_dim
    for _ in range(num_hidden_layers):
        key, kw, kb = jax.random.split(key, 3)
        bound = 1.0 / (last_dim ** 0.5)
        w = jax.random.uniform(kw, (last_dim, hidden_dim), jnp.float32,
                               -bound, bound)
        b = jax.random.uniform(kb, (1, hidden_dim), jnp.float32, -bound, bound)
        layer = {"w": w.astype(weight_dtype), "b": b}
        if layernorm_switch:
            layer["gamma"] = jnp.ones((1, hidden_dim), jnp.float32)
            layer["beta"] = jnp.zeros((1, hidden_dim), jnp.float32)
        else:
            layer["gamma"] = None
            layer["beta"] = None
        params.append(layer)
        last_dim = hidden_dim
    key, kw, kb = jax.random.split(key, 3)
    bound = 1.0 / (last_dim ** 0.5)
    w = jax.random.uniform(kw, (last_dim, output_dim), jnp.float32,
                           -bound, bound)
    b = jax.random.uniform(kb, (1, output_dim), jnp.float32, -bound, bound)
    params.append({"w": w.astype(weight_dtype), "b": b})
    return params


# ----------------------------------------------------------------------------
# Pure-JAX reference mirroring the kernel numerics (bf16 MXU operands, f32 LN
# stats, epilogue in `compute_dtype`)
# ----------------------------------------------------------------------------
def mlp_reference(x, params, *, eps=1e-5, compute_dtype=jnp.float32):
    h = x.astype(jnp.float32)
    for layer in params[:-1]:
        w = layer["w"]
        h = jnp.dot(h.astype(w.dtype), w, preferred_element_type=jnp.float32)
        h = h + layer["b"].astype(jnp.float32)
        if layer.get("gamma") is not None:
            mean = jnp.mean(h, axis=-1, keepdims=True)
            var = jnp.mean((h - mean) ** 2, axis=-1, keepdims=True)
            h = (h - mean) * jax.lax.rsqrt(var + eps)
            h = (h * layer["gamma"].astype(jnp.float32)
                 + layer["beta"].astype(jnp.float32))
        h = h.astype(compute_dtype)
        h = h * jax.nn.sigmoid(h)  # SiLU
    final = params[-1]
    w = final["w"]
    y = jnp.dot(h.astype(w.dtype), w, preferred_element_type=jnp.float32)
    return y + final["b"].astype(jnp.float32)


if __name__ == "__main__":
    # Small, module-consistent shapes.  block_rows is left at its large default
    # (512); the >=2-tile rule shrinks the tile so the grid still exercises
    # tiling (and both TCs on v7x).
    batch = 64
    input_dim = 32
    hidden_dim = 32
    output_dim = 16
    num_hidden_layers = 2

    key = jax.random.PRNGKey(0)
    key, kx = jax.random.split(key)
    x = jax.random.normal(kx, (batch, input_dim), jnp.float32)

    params = init_mlp_params(key, input_dim, hidden_dim, output_dim,
                             num_hidden_layers, layernorm_switch=True)

    epi = _default_epilogue_dtype()
    out = mlp_forward(x, params, epilogue_dtype=epi)
    out = jax.block_until_ready(out)
    assert out.shape == (batch, output_dim)

    ref = mlp_reference(x, params, compute_dtype=epi)
    tol = 2e-2 if epi == jnp.bfloat16 else 2e-3
    max_err = float(jnp.max(jnp.abs(out - ref)))
    assert jnp.allclose(out, ref, atol=tol, rtol=tol), (
        f"mismatch vs reference, max abs err = {max_err}")

    print("KERNEL_OK")
</pallas_src>

<mosaic_0001>
module attributes {stable_mosaic.version = 11 : i64} {
  func.func @_mlp_fused_kernel(%arg0: i32, %arg1: memref<32x128xf32, #tpu.memory_space<vmem>>, %arg2: memref<128x128xbf16, #tpu.memory_space<vmem>>, %arg3: memref<1x128xf32, #tpu.memory_space<vmem>>, %arg4: memref<1x128xf32, #tpu.memory_space<vmem>>, %arg5: memref<1x128xf32, #tpu.memory_space<vmem>>, %arg6: memref<128x128xbf16, #tpu.memory_space<vmem>>, %arg7: memref<1x128xf32, #tpu.memory_space<vmem>>, %arg8: memref<1x128xf32, #tpu.memory_space<vmem>>, %arg9: memref<1x128xf32, #tpu.memory_space<vmem>>, %arg10: memref<128x128xbf16, #tpu.memory_space<vmem>>, %arg11: memref<1x128xf32, #tpu.memory_space<vmem>>, %arg12: memref<32x128xf32, #tpu.memory_space<vmem>>) attributes {dimension_semantics = [#tpu.dimension_semantics<parallel>], iteration_bounds = array<i64: 2>, scalar_prefetch = 0 : i64, scratch_operands = 0 : i64, tpu.core_type = #tpu.core_type<tc>, window_params = [{transform_indices = @transform_0, window_bounds = array<i64: 32, 128>}, {pipeline_mode = #tpu.pipeline_mode<synchronous>, transform_indices = @transform_1, window_bounds = array<i64: 128, 128>}, {pipeline_mode = #tpu.pipeline_mode<synchronous>, transform_indices = @transform_2, window_bounds = array<i64: 1, 128>}, {pipeline_mode = #tpu.pipeline_mode<synchronous>, transform_indices = @transform_3, window_bounds = array<i64: 1, 128>}, {pipeline_mode = #tpu.pipeline_mode<synchronous>, transform_indices = @transform_4, window_bounds = array<i64: 1, 128>}, {pipeline_mode = #tpu.pipeline_mode<synchronous>, transform_indices = @transform_5, window_bounds = array<i64: 128, 128>}, {pipeline_mode = #tpu.pipeline_mode<synchronous>, transform_indices = @transform_6, window_bounds = array<i64: 1, 128>}, {pipeline_mode = #tpu.pipeline_mode<synchronous>, transform_indices = @transform_7, window_bounds = array<i64: 1, 128>}, {pipeline_mode = #tpu.pipeline_mode<synchronous>, transform_indices = @transform_8, window_bounds = array<i64: 1, 128>}, {pipeline_mode = #tpu.pipeline_mode<synchronous>, transform_indices = @transform_9, window_bounds = array<i64: 128, 128>}, {pipeline_mode = #tpu.pipeline_mode<synchronous>, transform_indices = @transform_10, window_bounds = array<i64: 1, 128>}, {transform_indices = @transform_11, window_bounds = array<i64: 32, 128>}]} {
    %c0 = arith.constant 0 : index
    %c0_0 = arith.constant 0 : index
    %0 = vector.load %arg1[%c0, %c0_0] : memref<32x128xf32, #tpu.memory_space<vmem>>, vector<32x128xf32>
    %c0_1 = arith.constant 0 : index
    %c0_2 = arith.constant 0 : index
    %1 = vector.load %arg2[%c0_1, %c0_2] : memref<128x128xbf16, #tpu.memory_space<vmem>>, vector<128x128xbf16>
    %2 = arith.truncf %0 : vector<32x128xf32> to vector<32x128xbf16>
    %cst = arith.constant dense<0.000000e+00> : vector<32x128xf32>
    %3 = tpu.matmul %2, %1, %cst {dimension_numbers = #tpu.dot_dimension_numbers<[1], [0], [0], [1], [0, 0, 1, 1], [], []>} : vector<32x128xbf16>, vector<128x128xbf16>, vector<32x128xf32> -> vector<32x128xf32>
    %c0_3 = arith.constant 0 : index
    %c0_4 = arith.constant 0 : index
    %4 = vector.load %arg3[%c0_3, %c0_4] : memref<1x128xf32, #tpu.memory_space<vmem>>, vector<1x128xf32>
    %5 = vector.broadcast %4 : vector<1x128xf32> to vector<32x128xf32>
    %6 = arith.addf %3, %5 : vector<32x128xf32>
    %cst_5 = arith.constant dense<0.000000e+00> : vector<32xf32>
    %7 = vector.multi_reduction <add>, %6, %cst_5 [1] : vector<32x128xf32> to vector<32xf32>
    %8 = vector.shape_cast %7 : vector<32xf32> to vector<32x1xf32>
    %cst_6 = arith.constant 3.125000e-02 : f32
    %9 = vector.broadcast %cst_6 : f32 to vector<32x1xf32>
    %10 = arith.mulf %8, %9 : vector<32x1xf32>
    %11 = vector.broadcast %10 : vector<32x1xf32> to vector<32x128xf32>
    %12 = arith.subf %6, %11 : vector<32x128xf32>
    %13 = tpu.iota {dimensions = array<i32: 1>} : vector<32x128xi32>
    %c32_i32 = arith.constant 32 : i32
    %14 = vector.broadcast %c32_i32 : i32 to vector<32x128xi32>
    %15 = arith.cmpi slt, %13, %14 : vector<32x128xi32>
    %cst_7 = arith.constant 0.000000e+00 : f32
    %16 = vector.broadcast %cst_7 : f32 to vector<32x128xf32>
    %17 = arith.select %15, %12, %16 : vector<32x128xi1>, vector<32x128xf32>
    %18 = arith.mulf %17, %17 : vector<32x128xf32>
    %cst_8 = arith.constant dense<0.000000e+00> : vector<32xf32>
    %19 = vector.multi_reduction <add>, %18, %cst_8 [1] : vector<32x128xf32> to vector<32xf32>
    %20 = vector.shape_cast %19 : vector<32xf32> to vector<32x1xf32>
    %cst_9 = arith.constant 3.125000e-02 : f32
    %21 = vector.broadcast %cst_9 : f32 to vector<32x1xf32>
    %22 = arith.mulf %20, %21 : vector<32x1xf32>
    %cst_10 = arith.constant 9.99999974E-6 : f32
    %23 = vector.broadcast %cst_10 : f32 to vector<32x1xf32>
    %24 = arith.addf %22, %23 : vector<32x1xf32>
    %25 = math.rsqrt %24 : vector<32x1xf32>
    %26 = vector.broadcast %25 : vector<32x1xf32> to vector<32x128xf32>
    %27 = arith.mulf %17, %26 : vector<32x128xf32>
    %c0_11 = arith.constant 0 : index
    %c0_12 = arith.constant 0 : index
    %28 = vector.load %arg4[%c0_11, %c0_12] : memref<1x128xf32, #tpu.memory_space<vmem>>, vector<1x128xf32>
    %29 = vector.broadcast %28 : vector<1x128xf32> to vector<32x128xf32>
    %30 = arith.mulf %27, %29 : vector<32x128xf32>
    %c0_13 = arith.constant 0 : index
    %c0_14 = arith.constant 0 : index
    %31 = vector.load %arg5[%c0_13, %c0_14] : memref<1x128xf32, #tpu.memory_space<vmem>>, vector<1x128xf32>
    %32 = vector.broadcast %31 : vector<1x128xf32> to vector<32x128xf32>
    %33 = arith.addf %30, %32 : vector<32x128xf32>
    %34 = arith.negf %33 : vector<32x128xf32>
    %35 = math.exp %34 : vector<32x128xf32>
    %cst_15 = arith.constant 1.000000e+00 : f32
    %36 = vector.broadcast %cst_15 : f32 to vector<32x128xf32>
    %37 = arith.addf %36, %35 : vector<32x128xf32>
    %38 = arith.divf %36, %37 : vector<32x128xf32>
    %39 = arith.mulf %33, %38 : vector<32x128xf32>
    %c0_16 = arith.constant 0 : index
    %c0_17 = arith.constant 0 : index
    %40 = vector.load %arg6[%c0_16, %c0_17] : memref<128x128xbf16, #tpu.memory_space<vmem>>, vector<128x128xbf16>
    %41 = arith.truncf %39 : vector<32x128xf32> to vector<32x128xbf16>
    %cst_18 = arith.constant dense<0.000000e+00> : vector<32x128xf32>
    %42 = tpu.matmul %41, %40, %cst_18 {dimension_numbers = #tpu.dot_dimension_numbers<[1], [0], [0], [1], [0, 0, 1, 1], [], []>} : vector<32x128xbf16>, vector<128x128xbf16>, vector<32x128xf32> -> vector<32x128xf32>
    %c0_19 = arith.constant 0 : index
    %c0_20 = arith.constant 0 : index
    %43 = vector.load %arg7[%c0_19, %c0_20] : memref<1x128xf32, #tpu.memory_space<vmem>>, vector<1x128xf32>
    %44 = vector.broadcast %43 : vector<1x128xf32> to vector<32x128xf32>
    %45 = arith.addf %42, %44 : vector<32x128xf32>
    %cst_21 = arith.constant dense<0.000000e+00> : vector<32xf32>
    %46 = vector.multi_reduction <add>, %45, %cst_21 [1] : vector<32x128xf32> to vector<32xf32>
    %47 = vector.shape_cast %46 : vector<32xf32> to vector<32x1xf32>
    %cst_22 = arith.constant 3.125000e-02 : f32
    %48 = vector.broadcast %cst_22 : f32 to vector<32x1xf32>
    %49 = arith.mulf %47, %48 : vector<32x1xf32>
    %50 = vector.broadcast %49 : vector<32x1xf32> to vector<32x128xf32>
    %51 = arith.subf %45, %50 : vector<32x128xf32>
    %52 = tpu.iota {dimensions = array<i32: 1>} : vector<32x128xi32>
    %c32_i32_23 = arith.constant 32 : i32
    %53 = vector.broadcast %c32_i32_23 : i32 to vector<32x128xi32>
    %54 = arith.cmpi slt, %52, %53 : vector<32x128xi32>
    %cst_24 = arith.constant 0.000000e+00 : f32
    %55 = vector.broadcast %cst_24 : f32 to vector<32x128xf32>
    %56 = arith.select %54, %51, %55 : vector<32x128xi1>, vector<32x128xf32>
    %57 = arith.mulf %56, %56 : vector<32x128xf32>
    %cst_25 = arith.constant dense<0.000000e+00> : vector<32xf32>
    %58 = vector.multi_reduction <add>, %57, %cst_25 [1] : vector<32x128xf32> to vector<32xf32>
    %59 = vector.shape_cast %58 : vector<32xf32> to vector<32x1xf32>
    %cst_26 = arith.constant 3.125000e-02 : f32
    %60 = vector.broadcast %cst_26 : f32 to vector<32x1xf32>
    %61 = arith.mulf %59, %60 : vector<32x1xf32>
    %cst_27 = arith.constant 9.99999974E-6 : f32
    %62 = vector.broadcast %cst_27 : f32 to vector<32x1xf32>
    %63 = arith.addf %61, %62 : vector<32x1xf32>
    %64 = math.rsqrt %63 : vector<32x1xf32>
    %65 = vector.broadcast %64 : vector<32x1xf32> to vector<32x128xf32>
    %66 = arith.mulf %56, %65 : vector<32x128xf32>
    %c0_28 = arith.constant 0 : index
    %c0_29 = arith.constant 0 : index
    %67 = vector.load %arg8[%c0_28, %c0_29] : memref<1x128xf32, #tpu.memory_space<vmem>>, vector<1x128xf32>
    %68 = vector.broadcast %67 : vector<1x128xf32> to vector<32x128xf32>
    %69 = arith.mulf %66, %68 : vector<32x128xf32>
    %c0_30 = arith.constant 0 : index
    %c0_31 = arith.constant 0 : index
    %70 = vector.load %arg9[%c0_30, %c0_31] : memref<1x128xf32, #tpu.memory_space<vmem>>, vector<1x128xf32>
    %71 = vector.broadcast %70 : vector<1x128xf32> to vector<32x128xf32>
    %72 = arith.addf %69, %71 : vector<32x128xf32>
    %73 = arith.negf %72 : vector<32x128xf32>
    %74 = math.exp %73 : vector<32x128xf32>
    %cst_32 = arith.constant 1.000000e+00 : f32
    %75 = vector.broadcast %cst_32 : f32 to vector<32x128xf32>
    %76 = arith.addf %75, %74 : vector<32x128xf32>
    %77 = arith.divf %75, %76 : vector<32x128xf32>
    %78 = arith.mulf %72, %77 : vector<32x128xf32>
    %c0_33 = arith.constant 0 : index
    %c0_34 = arith.constant 0 : index
    %79 = vector.load %arg10[%c0_33, %c0_34] : memref<128x128xbf16, #tpu.memory_space<vmem>>, vector<128x128xbf16>
    %80 = arith.truncf %78 : vector<32x128xf32> to vector<32x128xbf16>
    %cst_35 = arith.constant dense<0.000000e+00> : vector<32x128xf32>
    %81 = tpu.matmul %80, %79, %cst_35 {dimension_numbers = #tpu.dot_dimension_numbers<[1], [0], [0], [1], [0, 0, 1, 1], [], []>} : vector<32x128xbf16>, vector<128x128xbf16>, vector<32x128xf32> -> vector<32x128xf32>
    %c0_36 = arith.constant 0 : index
    %c0_37 = arith.constant 0 : index
    %82 = vector.load %arg11[%c0_36, %c0_37] : memref<1x128xf32, #tpu.memory_space<vmem>>, vector<1x128xf32>
    %83 = vector.broadcast %82 : vector<1x128xf32> to vector<32x128xf32>
    %84 = arith.addf %81, %83 : vector<32x128xf32>
    %c0_38 = arith.constant 0 : index
    %c0_39 = arith.constant 0 : index
    %85 = vector.load %arg12[%c0_38, %c0_39] : memref<32x128xf32, #tpu.memory_space<vmem>>, vector<32x128xf32>
    tpu.vector_store %arg12[%c0_38, %c0_39], %84 {strides = array<i32>} : memref<32x128xf32, #tpu.memory_space<vmem>>, vector<32x128xf32>,
    return
  }
  func.func @transform_0(%arg0: i32) -> (i32, i32) {
    %c0_i32 = arith.constant 0 : i32
    %c0_i32_0 = arith.constant 0 : i32
    return %arg0, %c0_i32 : i32, i32
  }
  func.func @transform_1(%arg0: i32) -> (i32, i32) {
    %c0_i32 = arith.constant 0 : i32
    %c0_i32_0 = arith.constant 0 : i32
    %c0_i32_1 = arith.constant 0 : i32
    return %c0_i32, %c0_i32_0 : i32, i32
  }
  func.func @transform_2(%arg0: i32) -> (i32, i32) {
    %c0_i32 = arith.constant 0 : i32
    %c0_i32_0 = arith.constant 0 : i32
    %c0_i32_1 = arith.constant 0 : i32
    return %c0_i32, %c0_i32_0 : i32, i32
  }
  func.func @transform_3(%arg0: i32) -> (i32, i32) {
    %c0_i32 = arith.constant 0 : i32
    %c0_i32_0 = arith.constant 0 : i32
    %c0_i32_1 = arith.constant 0 : i32
    return %c0_i32, %c0_i32_0 : i32, i32
  }
  func.func @transform_4(%arg0: i32) -> (i32, i32) {
    %c0_i32 = arith.constant 0 : i32
    %c0_i32_0 = arith.constant 0 : i32
    %c0_i32_1 = arith.constant 0 : i32
    return %c0_i32, %c0_i32_0 : i32, i32
  }
  func.func @transform_5(%arg0: i32) -> (i32, i32) {
    %c0_i32 = arith.constant 0 : i32
    %c0_i32_0 = arith.constant 0 : i32
    %c0_i32_1 = arith.constant 0 : i32
    return %c0_i32, %c0_i32_0 : i32, i32
  }
  func.func @transform_6(%arg0: i32) -> (i32, i32) {
    %c0_i32 = arith.constant 0 : i32
    %c0_i32_0 = arith.constant 0 : i32
    %c0_i32_1 = arith.constant 0 : i32
    return %c0_i32, %c0_i32_0 : i32, i32
  }
  func.func @transform_7(%arg0: i32) -> (i32, i32) {
    %c0_i32 = arith.constant 0 : i32
    %c0_i32_0 = arith.constant 0 : i32
    %c0_i32_1 = arith.constant 0 : i32
    return %c0_i32, %c0_i32_0 : i32, i32
  }
  func.func @transform_8(%arg0: i32) -> (i32, i32) {
    %c0_i32 = arith.constant 0 : i32
    %c0_i32_0 = arith.constant 0 : i32
    %c0_i32_1 = arith.constant 0 : i32
    return %c0_i32, %c0_i32_0 : i32, i32
  }
  func.func @transform_9(%arg0: i32) -> (i32, i32) {
    %c0_i32 = arith.constant 0 : i32
    %c0_i32_0 = arith.constant 0 : i32
    %c0_i32_1 = arith.constant 0 : i32
    return %c0_i32, %c0_i32_0 : i32, i32
  }
  func.func @transform_10(%arg0: i32) -> (i32, i32) {
    %c0_i32 = arith.constant 0 : i32
    %c0_i32_0 = arith.constant 0 : i32
    %c0_i32_1 = arith.constant 0 : i32
    return %c0_i32, %c0_i32_0 : i32, i32
  }
  func.func @transform_11(%arg0: i32) -> (i32, i32) {
    %c0_i32 = arith.constant 0 : i32
    %c0_i32_0 = arith.constant 0 : i32
    return %arg0, %c0_i32 : i32, i32
  }
}

module attributes {stable_mosaic.version = 11 : i64} {
  func.func @_mlp_fused_kernel(%arg0: i32, %arg1: memref<32x128xf32, #tpu.memory_space<vmem>>, %arg2: memref<128x128xbf16, #tpu.memory_space<vmem>>, %arg3: memref<1x128xf32, #tpu.memory_space<vmem>>, %arg4: memref<1x128xf32, #tpu.memory_space<vmem>>, %arg5: memref<1x128xf32, #tpu.memory_space<vmem>>, %arg6: memref<128x128xbf16, #tpu.memory_space<vmem>>, %arg7: memref<1x128xf32, #tpu.memory_space<vmem>>, %arg8: memref<1x128xf32, #tpu.memory_space<vmem>>, %arg9: memref<1x128xf32, #tpu.memory_space<vmem>>, %arg10: memref<128x128xbf16, #tpu.memory_space<vmem>>, %arg11: memref<1x128xf32, #tpu.memory_space<vmem>>, %arg12: memref<32x128xf32, #tpu.memory_space<vmem>>) attributes {dimension_semantics = [#tpu.dimension_semantics<parallel>], iteration_bounds = array<i64: 2>, scalar_prefetch = 0 : i64, scratch_operands = 0 : i64, tpu.core_type = #tpu.core_type<tc>, window_params = [{transform_indices = @transform_0, window_bounds = array<i64: 32, 128>}, {pipeline_mode = #tpu.pipeline_mode<synchronous>, transform_indices = @transform_1, window_bounds = array<i64: 128, 128>}, {pipeline_mode = #tpu.pipeline_mode<synchronous>, transform_indices = @transform_2, window_bounds = array<i64: 1, 128>}, {pipeline_mode = #tpu.pipeline_mode<synchronous>, transform_indices = @transform_3, window_bounds = array<i64: 1, 128>}, {pipeline_mode = #tpu.pipeline_mode<synchronous>, transform_indices = @transform_4, window_bounds = array<i64: 1, 128>}, {pipeline_mode = #tpu.pipeline_mode<synchronous>, transform_indices = @transform_5, window_bounds = array<i64: 128, 128>}, {pipeline_mode = #tpu.pipeline_mode<synchronous>, transform_indices = @transform_6, window_bounds = array<i64: 1, 128>}, {pipeline_mode = #tpu.pipeline_mode<synchronous>, transform_indices = @transform_7, window_bounds = array<i64: 1, 128>}, {pipeline_mode = #tpu.pipeline_mode<synchronous>, transform_indices = @transform_8, window_bounds = array<i64: 1, 128>}, {pipeline_mode = #tpu.pipeline_mode<synchronous>, transform_indices = @transform_9, window_bounds = array<i64: 128, 128>}, {pipeline_mode = #tpu.pipeline_mode<synchronous>, transform_indices = @transform_10, window_bounds = array<i64: 1, 128>}, {transform_indices = @transform_11, window_bounds = array<i64: 32, 128>}]} {
    %c0 = arith.constant 0 : index
    %c0_0 = arith.constant 0 : index
    %0 = vector.load %arg1[%c0, %c0_0] : memref<32x128xf32, #tpu.memory_space<vmem>>, vector<32x128xf32>
    %c0_1 = arith.constant 0 : index
    %c0_2 = arith.constant 0 : index
    %1 = vector.load %arg2[%c0_1, %c0_2] : memref<128x128xbf16, #tpu.memory_space<vmem>>, vector<128x128xbf16>
    %2 = arith.truncf %0 : vector<32x128xf32> to vector<32x128xbf16>
    %cst = arith.constant dense<0.000000e+00> : vector<32x128xf32>
    %3 = tpu.matmul %2, %1, %cst {dimension_numbers = #tpu.dot_dimension_numbers<[1], [0], [0], [1], [0, 0, 1, 1], [], []>} : vector<32x128xbf16>, vector<128x128xbf16>, vector<32x128xf32> -> vector<32x128xf32>
    %c0_3 = arith.constant 0 : index
    %c0_4 = arith.constant 0 : index
    %4 = vector.load %arg3[%c0_3, %c0_4] : memref<1x128xf32, #tpu.memory_space<vmem>>, vector<1x128xf32>
    %5 = vector.broadcast %4 : vector<1x128xf32> to vector<32x128xf32>
    %6 = arith.addf %3, %5 : vector<32x128xf32>
    %cst_5 = arith.constant dense<0.000000e+00> : vector<32xf32>
    %7 = vector.multi_reduction <add>, %6, %cst_5 [1] : vector<32x128xf32> to vector<32xf32>
    %8 = vector.shape_cast %7 : vector<32xf32> to vector<32x1xf32>
    %cst_6 = arith.constant 3.125000e-02 : f32
    %9 = vector.broadcast %cst_6 : f32 to vector<32x1xf32>
    %10 = arith.mulf %8, %9 : vector<32x1xf32>
    %11 = vector.broadcast %10 : vector<32x1xf32> to vector<32x128xf32>
    %12 = arith.subf %6, %11 : vector<32x128xf32>
    %13 = tpu.iota {dimensions = array<i32: 1>} : vector<32x128xi32>
    %c32_i32 = arith.constant 32 : i32
    %14 = vector.broadcast %c32_i32 : i32 to vector<32x128xi32>
    %15 = arith.cmpi slt, %13, %14 : vector<32x128xi32>
    %cst_7 = arith.constant 0.000000e+00 : f32
    %16 = vector.broadcast %cst_7 : f32 to vector<32x128xf32>
    %17 = arith.select %15, %12, %16 : vector<32x128xi1>, vector<32x128xf32>
    %18 = arith.mulf %17, %17 : vector<32x128xf32>
    %cst_8 = arith.constant dense<0.000000e+00> : vector<32xf32>
    %19 = vector.multi_reduction <add>, %18, %cst_8 [1] : vector<32x128xf32> to vector<32xf32>
    %20 = vector.shape_cast %19 : vector<32xf32> to vector<32x1xf32>
    %cst_9 = arith.constant 3.125000e-02 : f32
    %21 = vector.broadcast %cst_9 : f32 to vector<32x1xf32>
    %22 = arith.mulf %20, %21 : vector<32x1xf32>
    %cst_10 = arith.constant 9.99999974E-6 : f32
    %23 = vector.broadcast %cst_10 : f32 to vector<32x1xf32>
    %24 = arith.addf %22, %23 : vector<32x1xf32>
    %25 = math.rsqrt %24 : vector<32x1xf32>
    %26 = vector.broadcast %25 : vector<32x1xf32> to vector<32x128xf32>
    %27 = arith.mulf %17, %26 : vector<32x128xf32>
    %c0_11 = arith.constant 0 : index
    %c0_12 = arith.constant 0 : index
    %28 = vector.load %arg4[%c0_11, %c0_12] : memref<1x128xf32, #tpu.memory_space<vmem>>, vector<1x128xf32>
    %29 = vector.broadcast %28 : vector<1x128xf32> to vector<32x128xf32>
    %30 = arith.mulf %27, %29 : vector<32x128xf32>
    %c0_13 = arith.constant 0 : index
    %c0_14 = arith.constant 0 : index
    %31 = vector.load %arg5[%c0_13, %c0_14] : memref<1x128xf32, #tpu.memory_space<vmem>>, vector<1x128xf32>
    %32 = vector.broadcast %31 : vector<1x128xf32> to vector<32x128xf32>
    %33 = arith.addf %30, %32 : vector<32x128xf32>
    %34 = arith.negf %33 : vector<32x128xf32>
    %35 = math.exp %34 : vector<32x128xf32>
    %cst_15 = arith.constant 1.000000e+00 : f32
    %36 = vector.broadcast %cst_15 : f32 to vector<32x128xf32>
    %37 = arith.addf %36, %35 : vector<32x128xf32>
    %38 = arith.divf %36, %37 : vector<32x128xf32>
    %39 = arith.mulf %33, %38 : vector<32x128xf32>
    %c0_16 = arith.constant 0 : index
    %c0_17 = arith.constant 0 : index
    %40 = vector.load %arg6[%c0_16, %c0_17] : memref<128x128xbf16, #tpu.memory_space<vmem>>, vector<128x128xbf16>
    %41 = arith.truncf %39 : vector<32x128xf32> to vector<32x128xbf16>
    %cst_18 = arith.constant dense<0.000000e+00> : vector<32x128xf32>
    %42 = tpu.matmul %41, %40, %cst_18 {dimension_numbers = #tpu.dot_dimension_numbers<[1], [0], [0], [1], [0, 0, 1, 1], [], []>} : vector<32x128xbf16>, vector<128x128xbf16>, vector<32x128xf32> -> vector<32x128xf32>
    %c0_19 = arith.constant 0 : index
    %c0_20 = arith.constant 0 : index
    %43 = vector.load %arg7[%c0_19, %c0_20] : memref<1x128xf32, #tpu.memory_space<vmem>>, vector<1x128xf32>
    %44 = vector.broadcast %43 : vector<1x128xf32> to vector<32x128xf32>
    %45 = arith.addf %42, %44 : vector<32x128xf32>
    %cst_21 = arith.constant dense<0.000000e+00> : vector<32xf32>
    %46 = vector.multi_reduction <add>, %45, %cst_21 [1] : vector<32x128xf32> to vector<32xf32>
    %47 = vector.shape_cast %46 : vector<32xf32> to vector<32x1xf32>
    %cst_22 = arith.constant 3.125000e-02 : f32
    %48 = vector.broadcast %cst_22 : f32 to vector<32x1xf32>
    %49 = arith.mulf %47, %48 : vector<32x1xf32>
    %50 = vector.broadcast %49 : vector<32x1xf32> to vector<32x128xf32>
    %51 = arith.subf %45, %50 : vector<32x128xf32>
    %52 = tpu.iota {dimensions = array<i32: 1>} : vector<32x128xi32>
    %c32_i32_23 = arith.constant 32 : i32
    %53 = vector.broadcast %c32_i32_23 : i32 to vector<32x128xi32>
    %54 = arith.cmpi slt, %52, %53 : vector<32x128xi32>
    %cst_24 = arith.constant 0.000000e+00 : f32
    %55 = vector.broadcast %cst_24 : f32 to vector<32x128xf32>
    %56 = arith.select %54, %51, %55 : vector<32x128xi1>, vector<32x128xf32>
    %57 = arith.mulf %56, %56 : vector<32x128xf32>
    %cst_25 = arith.constant dense<0.000000e+00> : vector<32xf32>
    %58 = vector.multi_reduction <add>, %57, %cst_25 [1] : vector<32x128xf32> to vector<32xf32>
    %59 = vector.shape_cast %58 : vector<32xf32> to vector<32x1xf32>
    %cst_26 = arith.constant 3.125000e-02 : f32
    %60 = vector.broadcast %cst_26 : f32 to vector<32x1xf32>
    %61 = arith.mulf %59, %60 : vector<32x1xf32>
    %cst_27 = arith.constant 9.99999974E-6 : f32
    %62 = vector.broadcast %cst_27 : f32 to vector<32x1xf32>
    %63 = arith.addf %61, %62 : vector<32x1xf32>
    %64 = math.rsqrt %63 : vector<32x1xf32>
    %65 = vector.broadcast %64 : vector<32x1xf32> to vector<32x128xf32>
    %66 = arith.mulf %56, %65 : vector<32x128xf32>
    %c0_28 = arith.constant 0 : index
    %c0_29 = arith.constant 0 : index
    %67 = vector.load %arg8[%c0_28, %c0_29] : memref<1x128xf32, #tpu.memory_space<vmem>>, vector<1x128xf32>
    %68 = vector.broadcast %67 : vector<1x128xf32> to vector<32x128xf32>
    %69 = arith.mulf %66, %68 : vector<32x128xf32>
    %c0_30 = arith.constant 0 : index
    %c0_31 = arith.constant 0 : index
    %70 = vector.load %arg9[%c0_30, %c0_31] : memref<1x128xf32, #tpu.memory_space<vmem>>, vector<1x128xf32>
    %71 = vector.broadcast %70 : vector<1x128xf32> to vector<32x128xf32>
    %72 = arith.addf %69, %71 : vector<32x128xf32>
    %73 = arith.negf %72 : vector<32x128xf32>
    %74 = math.exp %73 : vector<32x128xf32>
    %cst_32 = arith.constant 1.000000e+00 : f32
    %75 = vector.broadcast %cst_32 : f32 to vector<32x128xf32>
    %76 = arith.addf %75, %74 : vector<32x128xf32>
    %77 = arith.divf %75, %76 : vector<32x128xf32>
    %78 = arith.mulf %72, %77 : vector<32x128xf32>
    %c0_33 = arith.constant 0 : index
    %c0_34 = arith.constant 0 : index
    %79 = vector.load %arg10[%c0_33, %c0_34] : memref<128x128xbf16, #tpu.memory_space<vmem>>, vector<128x128xbf16>
    %80 = arith.truncf %78 : vector<32x128xf32> to vector<32x128xbf16>
    %cst_35 = arith.constant dense<0.000000e+00> : vector<32x128xf32>
    %81 = tpu.matmul %80, %79, %cst_35 {dimension_numbers = #tpu.dot_dimension_numbers<[1], [0], [0], [1], [0, 0, 1, 1], [], []>} : vector<32x128xbf16>, vector<128x128xbf16>, vector<32x128xf32> -> vector<32x128xf32>
    %c0_36 = arith.constant 0 : index
    %c0_37 = arith.constant 0 : index
    %82 = vector.load %arg11[%c0_36, %c0_37] : memref<1x128xf32, #tpu.memory_space<vmem>>, vector<1x128xf32>
    %83 = vector.broadcast %82 : vector<1x128xf32> to vector<32x128xf32>
    %84 = arith.addf %81, %83 : vector<32x128xf32>
    %c0_38 = arith.constant 0 : index
    %c0_39 = arith.constant 0 : index
    %85 = vector.load %arg12[%c0_38, %c0_39] : memref<32x128xf32, #tpu.memory_space<vmem>>, vector<32x128xf32>
    tpu.vector_store %arg12[%c0_38, %c0_39], %84 {strides = array<i32>} : memref<32x128xf32, #tpu.memory_space<vmem>>, vector<32x128xf32>,
    return
  }
  func.func @transform_0(%arg0: i32) -> (i32, i32) {
    %c0_i32 = arith.constant 0 : i32
    %c0_i32_0 = arith.constant 0 : i32
    return %arg0, %c0_i32 : i32, i32
  }
  func.func @transform_1(%arg0: i32) -> (i32, i32) {
    %c0_i32 = arith.constant 0 : i32
    %c0_i32_0 = arith.constant 0 : i32
    %c0_i32_1 = arith.constant 0 : i32
    return %c0_i32, %c0_i32_0 : i32, i32
  }
  func.func @transform_2(%arg0: i32) -> (i32, i32) {
    %c0_i32 = arith.constant 0 : i32
    %c0_i32_0 = arith.constant 0 : i32
    %c0_i32_1 = arith.constant 0 : i32
    return %c0_i32, %c0_i32_0 : i32, i32
  }
  func.func @transform_3(%arg0: i32) -> (i32, i32) {
    %c0_i32 = arith.constant 0 : i32
    %c0_i32_0 = arith.constant 0 : i32
    %c0_i32_1 = arith.constant 0 : i32
    return %c0_i32, %c0_i32_0 : i32, i32
  }
  func.func @transform_4(%arg0: i32) -> (i32, i32) {
    %c0_i32 = arith.constant 0 : i32
    %c0_i32_0 = arith.constant 0 : i32
    %c0_i32_1 = arith.constant 0 : i32
    return %c0_i32, %c0_i32_0 : i32, i32
  }
  func.func @transform_5(%arg0: i32) -> (i32, i32) {
    %c0_i32 = arith.constant 0 : i32
    %c0_i32_0 = arith.constant 0 : i32
    %c0_i32_1 = arith.constant 0 : i32
    return %c0_i32, %c0_i32_0 : i32, i32
  }
  func.func @transform_6(%arg0: i32) -> (i32, i32) {
    %c0_i32 = arith.constant 0 : i32
    %c0_i32_0 = arith.constant 0 : i32
    %c0_i32_1 = arith.constant 0 : i32
    return %c0_i32, %c0_i32_0 : i32, i32
  }
  func.func @transform_7(%arg0: i32) -> (i32, i32) {
    %c0_i32 = arith.constant 0 : i32
    %c0_i32_0 = arith.constant 0 : i32
    %c0_i32_1 = arith.constant 0 : i32
    return %c0_i32, %c0_i32_0 : i32, i32
  }
  func.func @transform_8(%arg0: i32) -> (i32, i32) {
    %c0_i32 = arith.constant 0 : i32
    %c0_i32_0 = arith.constant 0 : i32
    %c0_i32_1 = arith.constant 0 : i32
    return %c0_i32, %c0_i32_0 : i32, i32
  }
  func.func @transform_9(%arg0: i32) -> (i32, i32) {
    %c0_i32 = arith.constant 0 : i32
    %c0_i32_0 = arith.constant 0 : i32
    %c0_i32_1 = arith.constant 0 : i32
    return %c0_i32, %c0_i32_0 : i32, i32
  }
  func.func @transform_10(%arg0: i32) -> (i32, i32) {
    %c0_i32 = arith.constant 0 : i32
    %c0_i32_0 = arith.constant 0 : i32
    %c0_i32_1 = arith.constant 0 : i32
    return %c0_i32, %c0_i32_0 : i32, i32
  }
  func.func @transform_11(%arg0: i32) -> (i32, i32) {
    %c0_i32 = arith.constant 0 : i32
    %c0_i32_0 = arith.constant 0 : i32
    return %arg0, %c0_i32 : i32, i32
  }
}

</mosaic_0001>

<llo_original>
// kernel: tpu_custom_call.1
$region0: #{tpu_custom_call.1}
  #allocation0 [shape = 'u32[]', space=smem, size = 0x4, offset = 0x4, fixed_abs, tag = 'smem constant byte address 0x4 - core index']
  #allocation1 [shape = 'u32[144,128]{1,0:T(1,128)}', space=vmem, size = 0x12000, scoped, tag = 'internal scratch']
  %s0 = inlined_call_operand.hbm [shape: f32[64,128], index: 0, kind: input, shape index: {}]
  %s1 = inlined_call_operand.hbm [shape: bf16[128,128], index: 1, kind: input, shape index: {}]
  %s2 = inlined_call_operand.vmem [shape: f32[1,128], index: 2, kind: input, shape index: {}]
  %s3 = inlined_call_operand.vmem [shape: f32[1,128], index: 3, kind: input, shape index: {}]
  %s4 = inlined_call_operand.vmem [shape: f32[1,128], index: 4, kind: input, shape index: {}]
  %s5 = inlined_call_operand.hbm [shape: bf16[128,128], index: 5, kind: input, shape index: {}]
  %s6 = inlined_call_operand.vmem [shape: f32[1,128], index: 6, kind: input, shape index: {}]
  %s7 = inlined_call_operand.vmem [shape: f32[1,128], index: 7, kind: input, shape index: {}]
  %s8 = inlined_call_operand.vmem [shape: f32[1,128], index: 8, kind: input, shape index: {}]
  %s9 = inlined_call_operand.hbm [shape: bf16[128,128], index: 9, kind: input, shape index: {}]
  %s10 = inlined_call_operand.vmem [shape: f32[1,128], index: 10, kind: input, shape index: {}]
  %s11 = inlined_call_operand.hbm [shape: f32[64,128], index: 11, kind: output, shape index: {}]
  %s12 = sld [smem:[#allocation0]]
  $region93: #{tpu_custom_call.1} parent=0
    _
  %s14 = ssub.s32 1, %s12
  %s15 = scalar_select 0, %s14, %s12
  $region1: #{tpu_custom_call.1} parent=0
    #allocation2 [shape = 'u8[32768]{0}', space=vmem, size = 0x8000, scoped, tag = 'input window, operand 0']
    #allocation3 [shape = 's32[2]{0}', space=sflag, size = 0x8, scoped, tag = 'scoped memory for tpu_custom_call.1']
    #allocation4 [shape = 's32[2]{0}', space=sflag, size = 0x8, scoped, tag = 'scoped memory for tpu_custom_call.1']
    #allocation5 [shape = 'u8[32768]{0}', space=vmem, size = 0x8000, scoped, tag = 'input window, operand 1, single buffered']
    #allocation6 [shape = 's32[1]{0}', space=sflag, size = 0x4, scoped, tag = 'scoped memory for tpu_custom_call.1']
    #allocation7 [shape = 'u8[32768]{0}', space=vmem, size = 0x8000, scoped, tag = 'input window, operand 5, single buffered']
    #allocation8 [shape = 'u8[32768]{0}', space=vmem, size = 0x8000, scoped, tag = 'input window, operand 9, single buffered']
    #allocation9 [shape = 's32[1]{0}', space=sflag, size = 0x4, scoped, tag = 'scoped memory for tpu_custom_call.1']
    #allocation10 [shape = 'u8[32768]{0}', space=vmem, size = 0x8000, scoped, tag = 'output window, operand 0']
    %16 = vsyncpa [#allocation3], 0
    %s17 = scalar_lea.sflag [#allocation3], 1
    %18 = vsyncpa %s17, 0
    %19 = vsyncpa [#allocation6], 0
    %20 = vsyncpa [#allocation9], 0
    %21 = vsyncpa [#allocation4], 0
    %s22 = scalar_lea.sflag [#allocation4], 1
    %23 = vsyncpa %s22, 0
    loop: start=0, step=1, limit=4
    $region2: #{tpu_custom_call.1} parent=1 // loop_pre_header
      _
    $region3: #{tpu_custom_call.1} parent=1 // loop_header
      %s25 = sphi 0, %s29
      %p26 = scmp.ge.s32.totalorder %s25, 4
      %s35 = sphi 0, %s37
      %s38 = sphi 0, %s35
      %s39 = sphi 0, %s38
      %s55 = sphi 0, %s39
      %s59 = sphi 0, %s59
      %s61 = sphi 0, %s59
      %s62 = sphi 0, %s61
      %s76 = sphi 0, %s62
      %s80 = sphi 0, %s80
      %s82 = sphi 0, %s80
      %s83 = sphi 0, %s82
      %s97 = sphi 0, %s83
      %s101 = sphi 0, %s101
      %s103 = sphi 0, %s101
      %s104 = sphi 0, %s103
      %s118 = sphi 0, %s104
      %s122 = sphi 0, %s122
      %s124 = sphi 0, %s122
      %s125 = sphi 0, %s124
      %s139 = sphi 0, %s125
      %s143 = sphi 0, %s143
      %s145 = sphi 0, %s143
      %s146 = sphi 0, %s145
      %s160 = sphi 0, %s146
      %s164 = sphi 0, %s164
      %s166 = sphi 0, %s164
      %s167 = sphi 0, %s166
      %s181 = sphi 0, %s167
      %s185 = sphi 0, %s185
      %s187 = sphi 0, %s185
      %s188 = sphi 0, %s187
      %s202 = sphi 0, %s188
      %s206 = sphi 0, %s206
      %s208 = sphi 0, %s206
      %s209 = sphi 0, %s208
      %s223 = sphi 0, %s209
      %s227 = sphi 0, %s227
      %s229 = sphi 0, %s227
      %s230 = sphi 0, %s229
      %s244 = sphi 0, %s230
      %s248 = sphi 0, %s248
      %s250 = sphi 0, %s248
      %s251 = sphi 0, %s250
      %s265 = sphi 0, %s251
      %s271 = sphi 0, %s273
      %s274 = sphi 0, %s271
      %s275 = sphi 0, %s274
      %s291 = sphi 0, %s275
    $region4: #{tpu_custom_call.1} parent=1 // loop_header_branch
      %28 = sbr.rel (%p26) target = $region8
    $region5: #{tpu_custom_call.1} parent=1 // loop_body
      %s30 = ssub.s32 %s25, 1
      %s31 = ssub.s32 %s25, 2
      %s32 = sadd.s32 %s25, 1
      %s33 = ssub.s32 %s25, %s32
      %p34 = scmp.eq.s32.totalorder %s33, 0
      %s36 = sadd.s32 %s35, 1
      %s37 = scalar_select %p34, %s35, %s36
      %p40 = pneg %p34
      %p41 = scmp.eq.s32.totalorder %s25, 1
      %p42 = por %p40, %p41
      %p43 = scmp.ne.s32.totalorder %s35, %s38
      %p44 = scmp.eq.s32.totalorder %s25, 0
      %p45 = por %p43, %p44
      %p46 = scmp.ne.s32.totalorder %s35, %s38
      %p47 = scmp.eq.s32.totalorder %s30, 1
      %p48 = por %p46, %p47
      %p49 = scmp.ne.s32.totalorder %s38, %s39
      %p50 = scmp.eq.s32.totalorder %s30, 0
      %p51 = por %p49, %p50
      %p52 = scmp.ne.s32.totalorder %s38, %s39
      %p53 = scmp.eq.s32.totalorder %s31, 1
      %p54 = por %p52, %p53
      %p56 = scmp.ne.s32.totalorder %s39, %s55
      %p57 = scmp.eq.s32.totalorder %s31, 0
      %p58 = por %p56, %p57
      %s60 = sadd.s32 %s59, 1
      %p63 = scmp.eq.s32.totalorder %s25, 1
      %p64 = scmp.ne.s32.totalorder %s59, %s61
      %p65 = scmp.eq.s32.totalorder %s25, 0
      %p66 = por %p64, %p65
      %p67 = scmp.ne.s32.totalorder %s59, %s61
      %p68 = scmp.eq.s32.totalorder %s30, 1
      %p69 = por %p67, %p68
      %p70 = scmp.ne.s32.totalorder %s61, %s62
      %p71 = scmp.eq.s32.totalorder %s30, 0
      %p72 = por %p70, %p71
      %p73 = scmp.ne.s32.totalorder %s61, %s62
      %p74 = scmp.eq.s32.totalorder %s31, 1
      %p75 = por %p73, %p74
      %p77 = scmp.ne.s32.totalorder %s62, %s76
      %p78 = scmp.eq.s32.totalorder %s31, 0
      %p79 = por %p77, %p78
      %s81 = sadd.s32 %s80, 1
      %p84 = scmp.eq.s32.totalorder %s25, 1
      %p85 = scmp.ne.s32.totalorder %s80, %s82
      %p86 = scmp.eq.s32.totalorder %s25, 0
      %p87 = por %p85, %p86
      %p88 = scmp.ne.s32.totalorder %s80, %s82
      %p89 = scmp.eq.s32.totalorder %s30, 1
      %p90 = por %p88, %p89
      %p91 = scmp.ne.s32.totalorder %s82, %s83
      %p92 = scmp.eq.s32.totalorder %s30, 0
      %p93 = por %p91, %p92
      %p94 = scmp.ne.s32.totalorder %s82, %s83
      %p95 = scmp.eq.s32.totalorder %s31, 1
      %p96 = por %p94, %p95
      %p98 = scmp.ne.s32.totalorder %s83, %s97
      %p99 = scmp.eq.s32.totalorder %s31, 0
      %p100 = por %p98, %p99
      %s102 = sadd.s32 %s101, 1
      %p105 = scmp.eq.s32.totalorder %s25, 1
      %p106 = scmp.ne.s32.totalorder %s101, %s103
      %p107 = scmp.eq.s32.totalorder %s25, 0
      %p108 = por %p106, %p107
      %p109 = scmp.ne.s32.totalorder %s101, %s103
      %p110 = scmp.eq.s32.totalorder %s30, 1
      %p111 = por %p109, %p110
      %p112 = scmp.ne.s32.totalorder %s103, %s104
      %p113 = scmp.eq.s32.totalorder %s30, 0
      %p114 = por %p112, %p113
      %p115 = scmp.ne.s32.totalorder %s103, %s104
      %p116 = scmp.eq.s32.totalorder %s31, 1
      %p117 = por %p115, %p116
      %p119 = scmp.ne.s32.totalorder %s104, %s118
      %p120 = scmp.eq.s32.totalorder %s31, 0
      %p121 = por %p119, %p120
      %s123 = sadd.s32 %s122, 1
      %p126 = scmp.eq.s32.totalorder %s25, 1
      %p127 = scmp.ne.s32.totalorder %s122, %s124
      %p128 = scmp.eq.s32.totalorder %s25, 0
      %p129 = por %p127, %p128
      %p130 = scmp.ne.s32.totalorder %s122, %s124
      %p131 = scmp.eq.s32.totalorder %s30, 1
      %p132 = por %p130, %p131
      %p133 = scmp.ne.s32.totalorder %s124, %s125
      %p134 = scmp.eq.s32.totalorder %s30, 0
      %p135 = por %p133, %p134
      %p136 = scmp.ne.s32.totalorder %s124, %s125
      %p137 = scmp.eq.s32.totalorder %s31, 1
      %p138 = por %p136, %p137
      %p140 = scmp.ne.s32.totalorder %s125, %s139
      %p141 = scmp.eq.s32.totalorder %s31, 0
      %p142 = por %p140, %p141
      %s144 = sadd.s32 %s143, 1
      %p147 = scmp.eq.s32.totalorder %s25, 1
      %p148 = scmp.ne.s32.totalorder %s143, %s145
      %p149 = scmp.eq.s32.totalorder %s25, 0
      %p150 = por %p148, %p149
      %p151 = scmp.ne.s32.totalorder %s143, %s145
      %p152 = scmp.eq.s32.totalorder %s30, 1
      %p153 = por %p151, %p152
      %p154 = scmp.ne.s32.totalorder %s145, %s146
      %p155 = scmp.eq.s32.totalorder %s30, 0
      %p156 = por %p154, %p155
      %p157 = scmp.ne.s32.totalorder %s145, %s146
      %p158 = scmp.eq.s32.totalorder %s31, 1
      %p159 = por %p157, %p158
      %p161 = scmp.ne.s32.totalorder %s146, %s160
      %p162 = scmp.eq.s32.totalorder %s31, 0
      %p163 = por %p161, %p162
      %s165 = sadd.s32 %s164, 1
      %p168 = scmp.eq.s32.totalorder %s25, 1
      %p169 = scmp.ne.s32.totalorder %s164, %s166
      %p170 = scmp.eq.s32.totalorder %s25, 0
      %p171 = por %p169, %p170
      %p172 = scmp.ne.s32.totalorder %s164, %s166
      %p173 = scmp.eq.s32.totalorder %s30, 1
      %p174 = por %p172, %p173
      %p175 = scmp.ne.s32.totalorder %s166, %s167
      %p176 = scmp.eq.s32.totalorder %s30, 0
      %p177 = por %p175, %p176
      %p178 = scmp.ne.s32.totalorder %s166, %s167
      %p179 = scmp.eq.s32.totalorder %s31, 1
      %p180 = por %p178, %p179
      %p182 = scmp.ne.s32.totalorder %s167, %s181
      %p183 = scmp.eq.s32.totalorder %s31, 0
      %p184 = por %p182, %p183
      %s186 = sadd.s32 %s185, 1
      %p189 = scmp.eq.s32.totalorder %s25, 1
      %p190 = scmp.ne.s32.totalorder %s185, %s187
      %p191 = scmp.eq.s32.totalorder %s25, 0
      %p192 = por %p190, %p191
      %p193 = scmp.ne.s32.totalorder %s185, %s187
      %p194 = scmp.eq.s32.totalorder %s30, 1
      %p195 = por %p193, %p194
      %p196 = scmp.ne.s32.totalorder %s187, %s188
      %p197 = scmp.eq.s32.totalorder %s30, 0
      %p198 = por %p196, %p197
      %p199 = scmp.ne.s32.totalorder %s187, %s188
      %p200 = scmp.eq.s32.totalorder %s31, 1
      %p201 = por %p199, %p200
      %p203 = scmp.ne.s32.totalorder %s188, %s202
      %p204 = scmp.eq.s32.totalorder %s31, 0
      %p205 = por %p203, %p204
      %s207 = sadd.s32 %s206, 1
      %p210 = scmp.eq.s32.totalorder %s25, 1
      %p211 = scmp.ne.s32.totalorder %s206, %s208
      %p212 = scmp.eq.s32.totalorder %s25, 0
      %p213 = por %p211, %p212
      %p214 = scmp.ne.s32.totalorder %s206, %s208
      %p215 = scmp.eq.s32.totalorder %s30, 1
      %p216 = por %p214, %p215
      %p217 = scmp.ne.s32.totalorder %s208, %s209
      %p218 = scmp.eq.s32.totalorder %s30, 0
      %p219 = por %p217, %p218
      %p220 = scmp.ne.s32.totalorder %s208, %s209
      %p221 = scmp.eq.s32.totalorder %s31, 1
      %p222 = por %p220, %p221
      %p224 = scmp.ne.s32.totalorder %s209, %s223
      %p225 = scmp.eq.s32.totalorder %s31, 0
      %p226 = por %p224, %p225
      %s228 = sadd.s32 %s227, 1
      %p231 = scmp.eq.s32.totalorder %s25, 1
      %p232 = scmp.ne.s32.totalorder %s227, %s229
      %p233 = scmp.eq.s32.totalorder %s25, 0
      %p234 = por %p232, %p233
      %p235 = scmp.ne.s32.totalorder %s227, %s229
      %p236 = scmp.eq.s32.totalorder %s30, 1
      %p237 = por %p235, %p236
      %p238 = scmp.ne.s32.totalorder %s229, %s230
      %p239 = scmp.eq.s32.totalorder %s30, 0
      %p240 = por %p238, %p239
      %p241 = scmp.ne.s32.totalorder %s229, %s230
      %p242 = scmp.eq.s32.totalorder %s31, 1
      %p243 = por %p241, %p242
      %p245 = scmp.ne.s32.totalorder %s230, %s244
      %p246 = scmp.eq.s32.totalorder %s31, 0
      %p247 = por %p245, %p246
      %s249 = sadd.s32 %s248, 1
      %p252 = scmp.eq.s32.totalorder %s25, 1
      %p253 = scmp.ne.s32.totalorder %s248, %s250
      %p254 = scmp.eq.s32.totalorder %s25, 0
      %p255 = por %p253, %p254
      %p256 = scmp.ne.s32.totalorder %s248, %s250
      %p257 = scmp.eq.s32.totalorder %s30, 1
      %p258 = por %p256, %p257
      %p259 = scmp.ne.s32.totalorder %s250, %s251
      %p260 = scmp.eq.s32.totalorder %s30, 0
      %p261 = por %p259, %p260
      %p262 = scmp.ne.s32.totalorder %s250, %s251
      %p263 = scmp.eq.s32.totalorder %s31, 1
      %p264 = por %p262, %p263
      %p266 = scmp.ne.s32.totalorder %s251, %s265
      %p267 = scmp.eq.s32.totalorder %s31, 0
      %p268 = por %p266, %p267
      %s269 = ssub.s32 %s25, %s32
      %p270 = scmp.eq.s32.totalorder %s269, 0
      %s272 = sadd.s32 %s271, 1
      %s273 = scalar_select %p270, %s271, %s272
      %p276 = pneg %p270
      %p277 = scmp.eq.s32.totalorder %s25, 1
      %p278 = por %p276, %p277
      %p279 = scmp.ne.s32.totalorder %s271, %s274
      %p280 = scmp.eq.s32.totalorder %s25, 0
      %p281 = por %p279, %p280
      %p282 = scmp.ne.s32.totalorder %s271, %s274
      %p283 = scmp.eq.s32.totalorder %s30, 1
      %p284 = por %p282, %p283
      %p285 = scmp.ne.s32.totalorder %s274, %s275
      %p286 = scmp.eq.s32.totalorder %s30, 0
      %p287 = por %p285, %p286
      %p288 = scmp.ne.s32.totalorder %s274, %s275
      %p289 = scmp.eq.s32.totalorder %s31, 1
      %p290 = por %p288, %p289
      %p292 = scmp.ne.s32.totalorder %s275, %s291
      %p293 = scmp.eq.s32.totalorder %s31, 0
      %p294 = por %p292, %p293
      %p295 = scmp.le.s32.totalorder 1, %s25
      %p296 = scmp.lt.s32.totalorder %s25, 3
      %p297 = pnand %p295, %p296
      %p298 = pneg %p297
      // Predicated region
      $region9: #{tpu_custom_call.1} parent=5 // pred_check
        _
      $region10: #{tpu_custom_call.1} parent=5 // pred_check_branch
        %300 = sbr.rel (%p297) target = $region12
      $region11: #{tpu_custom_call.1} parent=5 // pred_region
        %s301 = ssub.s32 %s25, 1
        // Predicated region
        $region13: #{tpu_custom_call.1} parent=11 // pred_check
          %p302 = pneg %p72
        $region14: #{tpu_custom_call.1} parent=11 // pred_check_branch
          %304 = sbr.rel (%p302) target = $region16
        $region15: #{tpu_custom_call.1} parent=11 // pred_region
          %s306 = ssub.s32 1024, 1024
          %307 = vsyncadd [#allocation6], %s306
          %s308 = sshll.u32 [#allocation5], 4
          %s309 = int_to_ptr.vmem [resolvable:$true] %s308
          %314 = dma.hbm_to_vmem [thread:$0]  %s1, 1024, %s309, [#allocation6], 64, 64, 4
        $region16: #{tpu_custom_call.1} parent=11 // pred_fallthru
          _
        // Predicated region
        $region17: #{tpu_custom_call.1} parent=11 // pred_check
          %p315 = pneg %p93
        $region18: #{tpu_custom_call.1} parent=11 // pred_check_branch
          %317 = sbr.rel (%p315) target = $region20
        $region19: #{tpu_custom_call.1} parent=11 // pred_region
          _
        $region20: #{tpu_custom_call.1} parent=11 // pred_fallthru
          _
        // Predicated region
        $region21: #{tpu_custom_call.1} parent=11 // pred_check
          %p318 = pneg %p114
        $region22: #{tpu_custom_call.1} parent=11 // pred_check_branch
          %320 = sbr.rel (%p318) target = $region24
        $region23: #{tpu_custom_call.1} parent=11 // pred_region
          _
        $region24: #{tpu_custom_call.1} parent=11 // pred_fallthru
          _
        // Predicated region
        $region25: #{tpu_custom_call.1} parent=11 // pred_check
          %p321 = pneg %p135
        $region26: #{tpu_custom_call.1} parent=11 // pred_check_branch
          %323 = sbr.rel (%p321) target = $region28
        $region27: #{tpu_custom_call.1} parent=11 // pred_region
          _
        $region28: #{tpu_custom_call.1} parent=11 // pred_fallthru
          _
        // Predicated region
        $region29: #{tpu_custom_call.1} parent=11 // pred_check
          %p324 = pneg %p156
        $region30: #{tpu_custom_call.1} parent=11 // pred_check_branch
          %326 = sbr.rel (%p324) target = $region32
        $region31: #{tpu_custom_call.1} parent=11 // pred_region
          %s328 = ssub.s32 1024, 1024
          %329 = vsyncadd [#allocation6], %s328
          %s330 = sshll.u32 [#allocation7], 4
          %s331 = int_to_ptr.vmem [resolvable:$true] %s330
          %336 = dma.hbm_to_vmem [thread:$0]  %s5, 1024, %s331, [#allocation6], 64, 64, 4
        $region32: #{tpu_custom_call.1} parent=11 // pred_fallthru
          _
        // Predicated region
        $region33: #{tpu_custom_call.1} parent=11 // pred_check
          %p337 = pneg %p177
        $region34: #{tpu_custom_call.1} parent=11 // pred_check_branch
          %339 = sbr.rel (%p337) target = $region36
        $region35: #{tpu_custom_call.1} parent=11 // pred_region
          _
        $region36: #{tpu_custom_call.1} parent=11 // pred_fallthru
          _
        // Predicated region
        $region37: #{tpu_custom_call.1} parent=11 // pred_check
          %p340 = pneg %p198
        $region38: #{tpu_custom_call.1} parent=11 // pred_check_branch
          %342 = sbr.rel (%p340) target = $region40
        $region39: #{tpu_custom_call.1} parent=11 // pred_region
          _
        $region40: #{tpu_custom_call.1} parent=11 // pred_fallthru
          _
        // Predicated region
        $region41: #{tpu_custom_call.1} parent=11 // pred_check
          %p343 = pneg %p219
        $region42: #{tpu_custom_call.1} parent=11 // pred_check_branch
          %345 = sbr.rel (%p343) target = $region44
        $region43: #{tpu_custom_call.1} parent=11 // pred_region
          _
        $region44: #{tpu_custom_call.1} parent=11 // pred_fallthru
          _
        // Predicated region
        $region45: #{tpu_custom_call.1} parent=11 // pred_check
          %p346 = pneg %p240
        $region46: #{tpu_custom_call.1} parent=11 // pred_check_branch
          %348 = sbr.rel (%p346) target = $region48
        $region47: #{tpu_custom_call.1} parent=11 // pred_region
          %s350 = ssub.s32 1024, 1024
          %351 = vsyncadd [#allocation9], %s350
          %s352 = sshll.u32 [#allocation8], 4
          %s353 = int_to_ptr.vmem [resolvable:$true] %s352
          %358 = dma.hbm_to_vmem [thread:$0]  %s9, 1024, %s353, [#allocation9], 64, 64, 4
        $region48: #{tpu_custom_call.1} parent=11 // pred_fallthru
          _
        // Predicated region
        $region49: #{tpu_custom_call.1} parent=11 // pred_check
          %p359 = pneg %p261
        $region50: #{tpu_custom_call.1} parent=11 // pred_check_branch
          %361 = sbr.rel (%p359) target = $region52
        $region51: #{tpu_custom_call.1} parent=11 // pred_region
          _
        $region52: #{tpu_custom_call.1} parent=11 // pred_fallthru
          _
      $region12: #{tpu_custom_call.1} parent=5 // pred_fallthru
        _
      %p362 = scmp.lt.s32.totalorder %s25, 2
      // Predicated region
      $region53: #{tpu_custom_call.1} parent=5 // pred_check
        %p363 = pneg %p362
      $region54: #{tpu_custom_call.1} parent=5 // pred_check_branch
        %365 = sbr.rel (%p363) target = $region56
      $region55: #{tpu_custom_call.1} parent=5 // pred_region
        // Predicated region
        $region57: #{tpu_custom_call.1} parent=55 // pred_check
          %p366 = pneg %p45
        $region58: #{tpu_custom_call.1} parent=55 // pred_check_branch
          %368 = sbr.rel (%p366) target = $region60
        $region59: #{tpu_custom_call.1} parent=55 // pred_region
          %s369 = sand.u32 %s35, 1
          %s370 = scalar_lea.sflag [#allocation3], %s369
          %s371 = sand.u32 %s35, 1
          %s372 = smul.addr %s371, 32
          %s373 = scalar_lea.vmem [#allocation2], %s372
          %s374 = smul.u32 4, %s25
          %s376 = ssub.s32 512, 512
          %377 = vsyncadd %s370, %s376
          %s378 = smul.addr %s374, 128
          %s379 = scalar_lea.hbm %s0, %s378
          %s380 = sshll.u32 %s373, 4
          %s381 = int_to_ptr.vmem [resolvable:$true] %s380
          %386 = dma.hbm_to_vmem [thread:$0]  %s379, 512, %s381, %s370, 128, 128, 8
        $region60: #{tpu_custom_call.1} parent=55 // pred_fallthru
          _
      $region56: #{tpu_custom_call.1} parent=5 // pred_fallthru
        _
      %p387 = scmp.le.s32.totalorder 1, %s25
      %p388 = scmp.lt.s32.totalorder %s25, 3
      %p389 = pnand %p387, %p388
      %p390 = pneg %p389
      // Predicated region
      $region61: #{tpu_custom_call.1} parent=5 // pred_check
        _
      $region62: #{tpu_custom_call.1} parent=5 // pred_check_branch
        %392 = sbr.rel (%p389) target = $region64
      $region63: #{tpu_custom_call.1} parent=5 // pred_region
        %s393 = ssub.s32 %s25, 1
        %s394 = sand.u32 %s38, 1
        %s395 = scalar_lea.sflag [#allocation3], %s394
        %s396 = sand.u32 %s38, 1
        %s397 = smul.addr %s396, 32
        %s398 = scalar_lea.vmem [#allocation2], %s397
        // Predicated region
        $region65: #{tpu_custom_call.1} parent=63 // pred_check
          %p399 = pneg %p51
        $region66: #{tpu_custom_call.1} parent=63 // pred_check_branch
          %401 = sbr.rel (%p399) target = $region68
        $region67: #{tpu_custom_call.1} parent=63 // pred_region
          %402 = dma.done %s395, 512
        $region68: #{tpu_custom_call.1} parent=63 // pred_fallthru
          _
        // Predicated region
        $region69: #{tpu_custom_call.1} parent=63 // pred_check
          %p403 = pneg %p72
        $region70: #{tpu_custom_call.1} parent=63 // pred_check_branch
          %405 = sbr.rel (%p403) target = $region72
        $region71: #{tpu_custom_call.1} parent=63 // pred_region
          %406 = dma.done [#allocation6], 1024
        $region72: #{tpu_custom_call.1} parent=63 // pred_fallthru
          _
        // Predicated region
        $region73: #{tpu_custom_call.1} parent=63 // pred_check
          %p407 = pneg %p156
        $region74: #{tpu_custom_call.1} parent=63 // pred_check_branch
          %409 = sbr.rel (%p407) target = $region76
        $region75: #{tpu_custom_call.1} parent=63 // pred_region
          %410 = dma.done [#allocation6], 1024
        $region76: #{tpu_custom_call.1} parent=63 // pred_fallthru
          _
        // Predicated region
        $region77: #{tpu_custom_call.1} parent=63 // pred_check
          %p411 = pneg %p240
        $region78: #{tpu_custom_call.1} parent=63 // pred_check_branch
          %413 = sbr.rel (%p411) target = $region80
        $region79: #{tpu_custom_call.1} parent=63 // pred_region
          %414 = dma.done [#allocation9], 1024
        $region80: #{tpu_custom_call.1} parent=63 // pred_fallthru
          _
        %s415 = sand.u32 %s38, 1
        %s416 = scalar_lea.sflag [#allocation3], %s415
        %s417 = sand.u32 %s38, 1
        %s418 = smul.addr %s417, 32
        %s419 = scalar_lea.vmem [#allocation2], %s418
        %p420 = pneg %p51
        %p421 = pneg %p48
        %p422 = pneg %p72
        %p423 = pneg %p69
        %p424 = pneg %p93
        %p425 = pneg %p90
        %p426 = pneg %p114
        %p427 = pneg %p111
        %p428 = pneg %p135
        %p429 = pneg %p132
        %p430 = pneg %p156
        %p431 = pneg %p153
        %p432 = pneg %p177
        %p433 = pneg %p174
        %p434 = pneg %p198
        %p435 = pneg %p195
        %p436 = pneg %p219
        %p437 = pneg %p216
        %p438 = pneg %p240
        %p439 = pneg %p237
        %p440 = pneg %p261
        %p441 = pneg %p258
        %p442 = pneg %p287
        %p443 = pneg %p284
        %s444 = sand.u32 %s274, 1
        %s445 = scalar_lea.sflag [#allocation4], %s444
        %s446 = sand.u32 %s274, 1
        %s447 = smul.addr %s446, 32
        %s448 = scalar_lea.vmem [#allocation10], %s447
        %s449 = smul.u32 4, %s30
        %s450 = smul.u32 4, %s30
        %v452 = vld [vmem:[%s398] sm:$0xff]
        %v453 = vld [vmem:[%s398 + $0x8] sm:$0xff]
        %v454 = vld [vmem:[%s398 + $0x10] sm:$0xff]
        %v455 = vld [vmem:[%s398 + $0x18] sm:$0xff]
        %v456 = vld [vmem:[#allocation5] sm:$0xf]
        %v457 = vld [vmem:[#allocation5 + $0x4] sm:$0xf]
        %v458 = vld [vmem:[#allocation5 + $0x8] sm:$0xf]
        %v459 = vld [vmem:[#allocation5 + $0xc] sm:$0xf]
        %v460 = vld [vmem:[#allocation5 + $0x10] sm:$0xf]
        %v461 = vld [vmem:[#allocation5 + $0x14] sm:$0xf]
        %v462 = vld [vmem:[#allocation5 + $0x18] sm:$0xf]
        %v463 = vld [vmem:[#allocation5 + $0x1c] sm:$0xf]
        %v464 = vld [vmem:[#allocation5 + $0x20] sm:$0xf]
        %v465 = vld [vmem:[#allocation5 + $0x24] sm:$0xf]
        %v466 = vld [vmem:[#allocation5 + $0x28] sm:$0xf]
        %v467 = vld [vmem:[#allocation5 + $0x2c] sm:$0xf]
        %v468 = vld [vmem:[#allocation5 + $0x30] sm:$0xf]
        %v469 = vld [vmem:[#allocation5 + $0x34] sm:$0xf]
        %v470 = vld [vmem:[#allocation5 + $0x38] sm:$0xf]
        %v471 = vld [vmem:[#allocation5 + $0x3c] sm:$0xf]
        %v472 = vpack.c.bf16 %v453, %v452
        %v473 = vpack.c.bf16 %v455, %v454
        %v474 = vld [vmem:[%s2] sm:$0x1]
        %v476 = vlaneseq
        %v477 = vshrl.u32 %v476, 7
        %v478 = vsub.s32 0, %v477
        %v479 = vrot.slane %v474, %v478
        %v497 = vunpack.c.l.b16 %v456
        %v498 = vunpack.c.l.b16 %v457
        %v499 = vunpack.c.l.b16 %v458
        %v500 = vunpack.c.l.b16 %v459
        %v501 = vunpack.c.l.b16 %v460
        %v502 = vunpack.c.l.b16 %v461
        %v503 = vunpack.c.l.b16 %v462
        %v504 = vunpack.c.l.b16 %v463
        %v505 = vunpack.c.l.b16 %v464
        %v506 = vunpack.c.l.b16 %v465
        %v507 = vunpack.c.l.b16 %v466
        %v508 = vunpack.c.l.b16 %v467
        %v509 = vunpack.c.l.b16 %v468
        %v510 = vunpack.c.l.b16 %v469
        %v511 = vunpack.c.l.b16 %v470
        %v512 = vunpack.c.l.b16 %v471
        %v513 = vpack.c.b16 %v498, %v497
        %v514 = vpack.c.b16 %v500, %v499
        %v515 = vpack.c.b16 %v502, %v501
        %v516 = vpack.c.b16 %v504, %v503
        %v517 = vpack.c.b16 %v506, %v505
        %v518 = vpack.c.b16 %v508, %v507
        %v519 = vpack.c.b16 %v510, %v509
        %v520 = vpack.c.b16 %v512, %v511
        %529 = vmatprep.subr.bf16.mxu0 0
        %530 = vmatpush1.bf16.msra.mxu0 %v520
        %531 = vmatprep.subr.bf16.mxu0 0
        %532 = vmatpush1.bf16.msra.mxu0 %v519
        %533 = vmatprep.subr.bf16.mxu0 0
        %534 = vmatpush1.bf16.msra.mxu0 %v518
        %535 = vmatprep.subr.bf16.mxu0 0
        %536 = vmatpush1.bf16.msra.mxu0 %v517
        %537 = vmatprep.subr.bf16.mxu0 0
        %538 = vmatpush1.bf16.msra.mxu0 %v516
        %539 = vmatprep.subr.bf16.mxu0 0
        %540 = vmatpush1.bf16.msra.mxu0 %v515
        %541 = vmatprep.subr.bf16.mxu0 0
        %542 = vmatpush1.bf16.msra.mxu0 %v514
        %543 = vmatprep.subr.bf16.mxu0 0
        %544 = vmatpush1.bf16.msra.mxu0 %v513
        %545 = vmatprep.subr.bf16.mxu0 0
        %546 = vmatpush2.bf16.msra.mxu0 0
        %547 = vmatprep.subr.bf16.mxu0 0
        %548 = vmatpush2.bf16.msra.mxu0 0
        %549 = vmatprep.subr.bf16.mxu0 0
        %550 = vmatpush2.bf16.msra.mxu0 0
        %551 = vmatprep.subr.bf16.mxu0 0
        %552 = vmatpush2.bf16.msra.mxu0 0
        %553 = vmatprep.subr.bf16.mxu0 0
        %554 = vmatpush2.bf16.msra.mxu0 0
        %555 = vmatprep.subr.bf16.mxu0 0
        %556 = vmatpush2.bf16.msra.mxu0 0
        %557 = vmatprep.subr.bf16.mxu0 0
        %558 = vmatpush2.bf16.msra.mxu0 0
        %559 = vmatprep.subr.bf16.mxu0 0
        %560 = vmatpush2.bf16.msra.mxu0 0
        %561 = vmatprep.mubr.bf16.mxu0 0
        %562 = vmatmul.mubr.bf16.gmra.mxu0 %v472
        %v563 = vpop.f32.mrf.mxu0
        %v564 = vadd.f32 %v479, %v563
        %v565 = vpop.f32.mrf.mxu0
        %v566 = vpop.f32.mrf.mxu0
        %v567 = vadd.f32 %v479, %v566
        %v568 = vpop.f32.mrf.mxu0
        %569 = vmatprep.mubr.bf16.mxu0 0
        %570 = vmatmul.mubr.bf16.gmra.mxu0 %v473
        %v571 = vpop.f32.mrf.mxu0
        %v572 = vadd.f32 %v479, %v571
        %v573 = vpop.f32.mrf.mxu0
        %v574 = vpop.f32.mrf.mxu0
        %v575 = vadd.f32 %v479, %v574
        %v576 = vpop.f32.mrf.mxu0
        %577 = vdwg.mxu0
        %578 = vadd.xlane.f32.xlu0 %v564
        %v579 = vpop.xlane.xlu0 %578
        %580 = vadd.xlane.f32.xlu0 %v567
        %v581 = vpop.xlane.xlu0 %580
        %582 = vadd.xlane.f32.xlu0 %v572
        %v583 = vpop.xlane.xlu0 %582
        %584 = vadd.xlane.f32.xlu0 %v575
        %v585 = vpop.xlane.xlu0 %584
        %v586 = vmul.f32 %v579, 0.03125
        %v587 = vmul.f32 %v581, 0.03125
        %v588 = vmul.f32 %v583, 0.03125
        %v589 = vmul.f32 %v585, 0.03125
        %v590 = vsub.f32 %v564, %v586
        %v591 = vsub.f32 %v567, %v587
        %v592 = vsub.f32 %v572, %v588
        %v593 = vsub.f32 %v575, %v589
        %v594 = vlaneseq
        %v595 = vand.u32 %v594, 127
        %vm596 = vcmp.lt.s32.totalorder %v595, 32
        %v597 = vsel %vm596, %v590, 0.0
        %v598 = vsel %vm596, %v591, 0.0
        %v599 = vsel %vm596, %v592, 0.0
        %v600 = vsel %vm596, %v593, 0.0
        %v601 = vmul.f32 %v597, %v597
        %v602 = vmul.f32 %v598, %v598
        %v603 = vmul.f32 %v599, %v599
        %v604 = vmul.f32 %v600, %v600
        %605 = vadd.xlane.f32.xlu0 %v601
        %v606 = vpop.xlane.xlu0 %605
        %607 = vadd.xlane.f32.xlu0 %v602
        %v608 = vpop.xlane.xlu0 %607
        %609 = vadd.xlane.f32.xlu0 %v603
        %v610 = vpop.xlane.xlu0 %609
        %611 = vadd.xlane.f32.xlu0 %v604
        %v612 = vpop.xlane.xlu0 %611
        %v613 = vmul.f32 %v606, 0.03125
        %v614 = vmul.f32 %v608, 0.03125
        %v615 = vmul.f32 %v610, 0.03125
        %v616 = vmul.f32 %v612, 0.03125
        %v617 = vadd.f32 %v613, 1e-05
        %v618 = vadd.f32 %v614, 1e-05
        %v619 = vadd.f32 %v615, 1e-05
        %v620 = vadd.f32 %v616, 1e-05
        %v621 = vrsqrt.pop %v617
        %v622 = vrsqrt.pop %v618
        %v623 = vrsqrt.pop %v619
        %v624 = vrsqrt.pop %v620
        %v625 = vmul.f32 %v597, %v621
        %v626 = vmul.f32 %v598, %v622
        %v627 = vmul.f32 %v599, %v623
        %v628 = vmul.f32 %v600, %v624
        %v629 = vld [vmem:[%s3] sm:$0x1]
        %v631 = vlaneseq
        %v632 = vshrl.u32 %v631, 7
        %v633 = vsub.s32 0, %v632
        %v634 = vrot.slane %v629, %v633
        %v636 = vmul.f32 %v625, %v634
        %v637 = vmul.f32 %v626, %v634
        %v638 = vmul.f32 %v627, %v634
        %v639 = vmul.f32 %v628, %v634
        %v640 = vld [vmem:[%s4] sm:$0x1]
        %v642 = vlaneseq
        %v643 = vshrl.u32 %v642, 7
        %v644 = vsub.s32 0, %v643
        %v645 = vrot.slane %v640, %v644
        %v647 = vadd.f32 %v636, %v645
        %v648 = vadd.f32 %v637, %v645
        %v649 = vadd.f32 %v638, %v645
        %v650 = vadd.f32 %v639, %v645
        %v651 = vxor.u32 %v647, 2147483648
        %v652 = vxor.u32 %v648, 2147483648
        %v653 = vxor.u32 %v649, 2147483648
        %v654 = vxor.u32 %v650, 2147483648
        %v655 = vmul.f32 %v651, 1.442695
        %v656 = vpow.pop %v655
        %v657 = vmul.f32 %v652, 1.442695
        %v658 = vpow.pop %v657
        %v659 = vmul.f32 %v653, 1.442695
        %v660 = vpow.pop %v659
        %v661 = vmul.f32 %v654, 1.442695
        %v662 = vpow.pop %v661
        %v663 = vadd.f32 %v656, 1.0
        %v664 = vadd.f32 %v658, 1.0
        %v665 = vadd.f32 %v660, 1.0
        %v666 = vadd.f32 %v662, 1.0
        %v667 = vrcp.pop %v663
        %v668 = vmul.f32 1.0, %v667
        %v669 = vrcp.pop %v664
        %v670 = vmul.f32 1.0, %v669
        %v671 = vrcp.pop %v665
        %v672 = vmul.f32 1.0, %v671
        %v673 = vrcp.pop %v666
        %v674 = vmul.f32 1.0, %v673
        %v675 = vmul.f32 %v647, %v668
        %v676 = vmul.f32 %v648, %v670
        %v677 = vmul.f32 %v649, %v672
        %v678 = vmul.f32 %v650, %v674
        %v679 = vld [vmem:[#allocation7] sm:$0xf]
        %v680 = vld [vmem:[#allocation7 + $0x4] sm:$0xf]
        %v681 = vld [vmem:[#allocation7 + $0x8] sm:$0xf]
        %v682 = vld [vmem:[#allocation7 + $0xc] sm:$0xf]
        %v683 = vld [vmem:[#allocation7 + $0x10] sm:$0xf]
        %v684 = vld [vmem:[#allocation7 + $0x14] sm:$0xf]
        %v685 = vld [vmem:[#allocation7 + $0x18] sm:$0xf]
        %v686 = vld [vmem:[#allocation7 + $0x1c] sm:$0xf]
        %v687 = vld [vmem:[#allocation7 + $0x20] sm:$0xf]
        %v688 = vld [vmem:[#allocation7 + $0x24] sm:$0xf]
        %v689 = vld [vmem:[#allocation7 + $0x28] sm:$0xf]
        %v690 = vld [vmem:[#allocation7 + $0x2c] sm:$0xf]
        %v691 = vld [vmem:[#allocation7 + $0x30] sm:$0xf]
        %v692 = vld [vmem:[#allocation7 + $0x34] sm:$0xf]
        %v693 = vld [vmem:[#allocation7 + $0x38] sm:$0xf]
        %v694 = vld [vmem:[#allocation7 + $0x3c] sm:$0xf]
        %v695 = vpack.c.bf16 %v676, %v675
        %v696 = vpack.c.bf16 %v678, %v677
        %v697 = vld [vmem:[%s6] sm:$0x1]
        %v699 = vlaneseq
        %v700 = vshrl.u32 %v699, 7
        %v701 = vsub.s32 0, %v700
        %v702 = vrot.slane %v697, %v701
        %v720 = vunpack.c.l.b16 %v679
        %v721 = vunpack.c.l.b16 %v680
        %v722 = vunpack.c.l.b16 %v681
        %v723 = vunpack.c.l.b16 %v682
        %v724 = vunpack.c.l.b16 %v683
        %v725 = vunpack.c.l.b16 %v684
        %v726 = vunpack.c.l.b16 %v685
        %v727 = vunpack.c.l.b16 %v686
        %v728 = vunpack.c.l.b16 %v687
        %v729 = vunpack.c.l.b16 %v688
        %v730 = vunpack.c.l.b16 %v689
        %v731 = vunpack.c.l.b16 %v690
        %v732 = vunpack.c.l.b16 %v691
        %v733 = vunpack.c.l.b16 %v692
        %v734 = vunpack.c.l.b16 %v693
        %v735 = vunpack.c.l.b16 %v694
        %v736 = vpack.c.b16 %v721, %v720
        %v737 = vpack.c.b16 %v723, %v722
        %v738 = vpack.c.b16 %v725, %v724
        %v739 = vpack.c.b16 %v727, %v726
        %v740 = vpack.c.b16 %v729, %v728
        %v741 = vpack.c.b16 %v731, %v730
        %v742 = vpack.c.b16 %v733, %v732
        %v743 = vpack.c.b16 %v735, %v734
        %752 = vmatprep.subr.bf16.mxu0 0
        %753 = vmatpush1.bf16.msra.mxu0 %v743
        %754 = vmatprep.subr.bf16.mxu0 0
        %755 = vmatpush1.bf16.msra.mxu0 %v742
        %756 = vmatprep.subr.bf16.mxu0 0
        %757 = vmatpush1.bf16.msra.mxu0 %v741
        %758 = vmatprep.subr.bf16.mxu0 0
        %759 = vmatpush1.bf16.msra.mxu0 %v740
        %760 = vmatprep.subr.bf16.mxu0 0
        %761 = vmatpush1.bf16.msra.mxu0 %v739
        %762 = vmatprep.subr.bf16.mxu0 0
        %763 = vmatpush1.bf16.msra.mxu0 %v738
        %764 = vmatprep.subr.bf16.mxu0 0
        %765 = vmatpush1.bf16.msra.mxu0 %v737
        %766 = vmatprep.subr.bf16.mxu0 0
        %767 = vmatpush1.bf16.msra.mxu0 %v736
        %768 = vmatprep.subr.bf16.mxu0 0
        %769 = vmatpush2.bf16.msra.mxu0 0
        %770 = vmatprep.subr.bf16.mxu0 0
        %771 = vmatpush2.bf16.msra.mxu0 0
        %772 = vmatprep.subr.bf16.mxu0 0
        %773 = vmatpush2.bf16.msra.mxu0 0
        %774 = vmatprep.subr.bf16.mxu0 0
        %775 = vmatpush2.bf16.msra.mxu0 0
        %776 = vmatprep.subr.bf16.mxu0 0
        %777 = vmatpush2.bf16.msra.mxu0 0
        %778 = vmatprep.subr.bf16.mxu0 0
        %779 = vmatpush2.bf16.msra.mxu0 0
        %780 = vmatprep.subr.bf16.mxu0 0
        %781 = vmatpush2.bf16.msra.mxu0 0
        %782 = vmatprep.subr.bf16.mxu0 0
        %783 = vmatpush2.bf16.msra.mxu0 0
        %784 = vmatprep.mubr.bf16.mxu0 0
        %785 = vmatmul.mubr.bf16.gmra.mxu0 %v695
        %v786 = vpop.f32.mrf.mxu0
        %v787 = vadd.f32 %v702, %v786
        %v788 = vpop.f32.mrf.mxu0
        %v789 = vpop.f32.mrf.mxu0
        %v790 = vadd.f32 %v702, %v789
        %v791 = vpop.f32.mrf.mxu0
        %792 = vmatprep.mubr.bf16.mxu0 0
        %793 = vmatmul.mubr.bf16.gmra.mxu0 %v696
        %v794 = vpop.f32.mrf.mxu0
        %v795 = vadd.f32 %v702, %v794
        %v796 = vpop.f32.mrf.mxu0
        %v797 = vpop.f32.mrf.mxu0
        %v798 = vadd.f32 %v702, %v797
        %v799 = vpop.f32.mrf.mxu0
        %800 = vdwg.mxu0
        %801 = vadd.xlane.f32.xlu0 %v787
        %v802 = vpop.xlane.xlu0 %801
        %803 = vadd.xlane.f32.xlu0 %v790
        %v804 = vpop.xlane.xlu0 %803
        %805 = vadd.xlane.f32.xlu0 %v795
        %v806 = vpop.xlane.xlu0 %805
        %807 = vadd.xlane.f32.xlu0 %v798
        %v808 = vpop.xlane.xlu0 %807
        %v809 = vmul.f32 %v802, 0.03125
        %v810 = vmul.f32 %v804, 0.03125
        %v811 = vmul.f32 %v806, 0.03125
        %v812 = vmul.f32 %v808, 0.03125
        %v813 = vsub.f32 %v787, %v809
        %v814 = vsub.f32 %v790, %v810
        %v815 = vsub.f32 %v795, %v811
        %v816 = vsub.f32 %v798, %v812
        %v817 = vsel %vm596, %v813, 0.0
        %v818 = vsel %vm596, %v814, 0.0
        %v819 = vsel %vm596, %v815, 0.0
        %v820 = vsel %vm596, %v816, 0.0
        %v821 = vmul.f32 %v817, %v817
        %v822 = vmul.f32 %v818, %v818
        %v823 = vmul.f32 %v819, %v819
        %v824 = vmul.f32 %v820, %v820
        %825 = vadd.xlane.f32.xlu0 %v821
        %v826 = vpop.xlane.xlu0 %825
        %827 = vadd.xlane.f32.xlu0 %v822
        %v828 = vpop.xlane.xlu0 %827
        %829 = vadd.xlane.f32.xlu0 %v823
        %v830 = vpop.xlane.xlu0 %829
        %831 = vadd.xlane.f32.xlu0 %v824
        %v832 = vpop.xlane.xlu0 %831
        %v833 = vmul.f32 %v826, 0.03125
        %v834 = vmul.f32 %v828, 0.03125
        %v835 = vmul.f32 %v830, 0.03125
        %v836 = vmul.f32 %v832, 0.03125
        %v837 = vadd.f32 %v833, 1e-05
        %v838 = vadd.f32 %v834, 1e-05
        %v839 = vadd.f32 %v835, 1e-05
        %v840 = vadd.f32 %v836, 1e-05
        %v841 = vrsqrt.pop %v837
        %v842 = vrsqrt.pop %v838
        %v843 = vrsqrt.pop %v839
        %v844 = vrsqrt.pop %v840
        %v845 = vmul.f32 %v817, %v841
        %v846 = vmul.f32 %v818, %v842
        %v847 = vmul.f32 %v819, %v843
        %v848 = vmul.f32 %v820, %v844
        %v849 = vld [vmem:[%s7] sm:$0x1]
        %v851 = vlaneseq
        %v852 = vshrl.u32 %v851, 7
        %v853 = vsub.s32 0, %v852
        %v854 = vrot.slane %v849, %v853
        %v856 = vmul.f32 %v845, %v854
        %v857 = vmul.f32 %v846, %v854
        %v858 = vmul.f32 %v847, %v854
        %v859 = vmul.f32 %v848, %v854
        %v860 = vld [vmem:[%s8] sm:$0x1]
        %v862 = vlaneseq
        %v863 = vshrl.u32 %v862, 7
        %v864 = vsub.s32 0, %v863
        %v865 = vrot.slane %v860, %v864
        %v867 = vadd.f32 %v856, %v865
        %v868 = vadd.f32 %v857, %v865
        %v869 = vadd.f32 %v858, %v865
        %v870 = vadd.f32 %v859, %v865
        %v871 = vxor.u32 %v867, 2147483648
        %v872 = vxor.u32 %v868, 2147483648
        %v873 = vxor.u32 %v869, 2147483648
        %v874 = vxor.u32 %v870, 2147483648
        %v875 = vmul.f32 %v871, 1.442695
        %v876 = vpow.pop %v875
        %v877 = vmul.f32 %v872, 1.442695
        %v878 = vpow.pop %v877
        %v879 = vmul.f32 %v873, 1.442695
        %v880 = vpow.pop %v879
        %v881 = vmul.f32 %v874, 1.442695
        %v882 = vpow.pop %v881
        %v883 = vadd.f32 %v876, 1.0
        %v884 = vadd.f32 %v878, 1.0
        %v885 = vadd.f32 %v880, 1.0
        %v886 = vadd.f32 %v882, 1.0
        %v887 = vrcp.pop %v883
        %v888 = vmul.f32 1.0, %v887
        %v889 = vrcp.pop %v884
        %v890 = vmul.f32 1.0, %v889
        %v891 = vrcp.pop %v885
        %v892 = vmul.f32 1.0, %v891
        %v893 = vrcp.pop %v886
        %v894 = vmul.f32 1.0, %v893
        %v895 = vmul.f32 %v867, %v888
        %v896 = vmul.f32 %v868, %v890
        %v897 = vmul.f32 %v869, %v892
        %v898 = vmul.f32 %v870, %v894
        %v899 = vld [vmem:[#allocation8] sm:$0xf]
        %v900 = vld [vmem:[#allocation8 + $0x4] sm:$0xf]
        %v901 = vld [vmem:[#allocation8 + $0x8] sm:$0xf]
        %v902 = vld [vmem:[#allocation8 + $0xc] sm:$0xf]
        %v903 = vld [vmem:[#allocation8 + $0x10] sm:$0xf]
        %v904 = vld [vmem:[#allocation8 + $0x14] sm:$0xf]
        %v905 = vld [vmem:[#allocation8 + $0x18] sm:$0xf]
        %v906 = vld [vmem:[#allocation8 + $0x1c] sm:$0xf]
        %v907 = vld [vmem:[#allocation8 + $0x20] sm:$0xf]
        %v908 = vld [vmem:[#allocation8 + $0x24] sm:$0xf]
        %v909 = vld [vmem:[#allocation8 + $0x28] sm:$0xf]
        %v910 = vld [vmem:[#allocation8 + $0x2c] sm:$0xf]
        %v911 = vld [vmem:[#allocation8 + $0x30] sm:$0xf]
        %v912 = vld [vmem:[#allocation8 + $0x34] sm:$0xf]
        %v913 = vld [vmem:[#allocation8 + $0x38] sm:$0xf]
        %v914 = vld [vmem:[#allocation8 + $0x3c] sm:$0xf]
        %v915 = vpack.c.bf16 %v896, %v895
        %v916 = vpack.c.bf16 %v898, %v897
        %v917 = vld [vmem:[%s10] sm:$0x1]
        %v919 = vlaneseq
        %v920 = vshrl.u32 %v919, 7
        %v921 = vsub.s32 0, %v920
        %v922 = vrot.slane %v917, %v921
        %v940 = vunpack.c.l.b16 %v899
        %v941 = vunpack.c.l.b16 %v900
        %v942 = vunpack.c.l.b16 %v901
        %v943 = vunpack.c.l.b16 %v902
        %v944 = vunpack.c.l.b16 %v903
        %v945 = vunpack.c.l.b16 %v904
        %v946 = vunpack.c.l.b16 %v905
        %v947 = vunpack.c.l.b16 %v906
        %v948 = vunpack.c.l.b16 %v907
        %v949 = vunpack.c.l.b16 %v908
        %v950 = vunpack.c.l.b16 %v909
        %v951 = vunpack.c.l.b16 %v910
        %v952 = vunpack.c.l.b16 %v911
        %v953 = vunpack.c.l.b16 %v912
        %v954 = vunpack.c.l.b16 %v913
        %v955 = vunpack.c.l.b16 %v914
        %v956 = vpack.c.b16 %v941, %v940
        %v957 = vpack.c.b16 %v943, %v942
        %v958 = vpack.c.b16 %v945, %v944
        %v959 = vpack.c.b16 %v947, %v946
        %v960 = vpack.c.b16 %v949, %v948
        %v961 = vpack.c.b16 %v951, %v950
        %v962 = vpack.c.b16 %v953, %v952
        %v963 = vpack.c.b16 %v955, %v954
        %972 = vmatprep.subr.bf16.mxu0 0
        %973 = vmatpush1.bf16.msra.mxu0 %v963
        %974 = vmatprep.subr.bf16.mxu0 0
        %975 = vmatpush1.bf16.msra.mxu0 %v962
        %976 = vmatprep.subr.bf16.mxu0 0
        %977 = vmatpush1.bf16.msra.mxu0 %v961
        %978 = vmatprep.subr.bf16.mxu0 0
        %979 = vmatpush1.bf16.msra.mxu0 %v960
        %980 = vmatprep.subr.bf16.mxu0 0
        %981 = vmatpush1.bf16.msra.mxu0 %v959
        %982 = vmatprep.subr.bf16.mxu0 0
        %983 = vmatpush1.bf16.msra.mxu0 %v958
        %984 = vmatprep.subr.bf16.mxu0 0
        %985 = vmatpush1.bf16.msra.mxu0 %v957
        %986 = vmatprep.subr.bf16.mxu0 0
        %987 = vmatpush1.bf16.msra.mxu0 %v956
        %988 = vmatprep.subr.bf16.mxu0 0
        %989 = vmatpush2.bf16.msra.mxu0 0
        %990 = vmatprep.subr.bf16.mxu0 0
        %991 = vmatpush2.bf16.msra.mxu0 0
        %992 = vmatprep.subr.bf16.mxu0 0
        %993 = vmatpush2.bf16.msra.mxu0 0
        %994 = vmatprep.subr.bf16.mxu0 0
        %995 = vmatpush2.bf16.msra.mxu0 0
        %996 = vmatprep.subr.bf16.mxu0 0
        %997 = vmatpush2.bf16.msra.mxu0 0
        %998 = vmatprep.subr.bf16.mxu0 0
        %999 = vmatpush2.bf16.msra.mxu0 0
        %1000 = vmatprep.subr.bf16.mxu0 0
        %1001 = vmatpush2.bf16.msra.mxu0 0
        %1002 = vmatprep.subr.bf16.mxu0 0
        %1003 = vmatpush2.bf16.msra.mxu0 0
        %1004 = vmatprep.mubr.bf16.mxu0 0
        %1005 = vmatmul.mubr.bf16.gmra.mxu0 %v915
        %v1006 = vpop.f32.mrf.mxu0
        %v1007 = vadd.f32 %v922, %v1006
        %v1008 = vpop.f32.mrf.mxu0
        %v1009 = vpop.f32.mrf.mxu0
        %v1010 = vadd.f32 %v922, %v1009
        %v1011 = vpop.f32.mrf.mxu0
        %1012 = vmatprep.mubr.bf16.mxu0 0
        %1013 = vmatmul.mubr.bf16.gmra.mxu0 %v916
        %v1014 = vpop.f32.mrf.mxu0
        %v1015 = vadd.f32 %v922, %v1014
        %v1016 = vpop.f32.mrf.mxu0
        %v1017 = vpop.f32.mrf.mxu0
        %v1018 = vadd.f32 %v922, %v1017
        %v1019 = vpop.f32.mrf.mxu0
        %1020 = vdwg.mxu0
        %1021 = vst [vmem:[%s448] sm:$0xff] %v1007
        %1022 = vst [vmem:[%s448 + $0x8] sm:$0xff] %v1010
        %1023 = vst [vmem:[%s448 + $0x10] sm:$0xff] %v1015
        %1024 = vst [vmem:[%s448 + $0x18] sm:$0xff] %v1018
        %s1025 = sand.u32 %s274, 1
        %s1026 = scalar_lea.sflag [#allocation4], %s1025
        %s1027 = sand.u32 %s274, 1
        %s1028 = smul.addr %s1027, 32
        %s1029 = scalar_lea.vmem [#allocation10], %s1028
        // Predicated region
        $region81: #{tpu_custom_call.1} parent=63 // pred_check
          %p1030 = pneg %p284
        $region82: #{tpu_custom_call.1} parent=63 // pred_check_branch
          %1032 = sbr.rel (%p1030) target = $region84
        $region83: #{tpu_custom_call.1} parent=63 // pred_region
          %s1033 = smul.u32 4, %s30
          %s1035 = ssub.s32 512, 512
          %1036 = vsyncadd %s1026, %s1035
          %s1037 = smul.addr %s1033, 128
          %s1038 = scalar_lea.hbm %s11, %s1037
          %s1039 = sshll.u32 %s1029, 4
          %s1040 = int_to_ptr.vmem [resolvable:$true] %s1039
          %1045 = dma.vmem_to_hbm [thread:$0]  %s1040, 512, %s1038, %s1026, 128, 128, 8
        $region84: #{tpu_custom_call.1} parent=63 // pred_fallthru
          _
      $region64: #{tpu_custom_call.1} parent=5 // pred_fallthru
        _
      %p1046 = scmp.le.s32.totalorder 2, %s25
      // Predicated region
      $region85: #{tpu_custom_call.1} parent=5 // pred_check
        %p1047 = pneg %p1046
      $region86: #{tpu_custom_call.1} parent=5 // pred_check_branch
        %1049 = sbr.rel (%p1047) target = $region88
      $region87: #{tpu_custom_call.1} parent=5 // pred_region
        %s1050 = ssub.s32 %s25, 2
        // Predicated region
        $region89: #{tpu_custom_call.1} parent=87 // pred_check
          %p1051 = pneg %p290
        $region90: #{tpu_custom_call.1} parent=87 // pred_check_branch
          %1053 = sbr.rel (%p1051) target = $region92
        $region91: #{tpu_custom_call.1} parent=87 // pred_region
          %s1054 = sand.u32 %s275, 1
          %s1055 = scalar_lea.sflag [#allocation4], %s1054
          %s1056 = sand.u32 %s275, 1
          %s1057 = smul.addr %s1056, 32
          %s1058 = scalar_lea.vmem [#allocation10], %s1057
          %1059 = dma.done %s1055, 512
        $region92: #{tpu_custom_call.1} parent=87 // pred_fallthru
          _
      $region88: #{tpu_custom_call.1} parent=5 // pred_fallthru
        _
    $region6: #{tpu_custom_call.1} parent=1 // loop_footer
      %s29 = sadd.s32 1, %s25
    $region7: #{tpu_custom_call.1} parent=1 // loop_footer_branch
      %24 = sbr.rel target = $region3
    $region8: #{tpu_custom_call.1} parent=1 // loop_exit
      _
    %1060 = vsyncpa [#allocation3], 1
    %s1061 = scalar_lea.sflag [#allocation3], 1
    %1062 = vsyncpa %s1061, 1
    %1063 = vsyncpa [#allocation6], 1
    %1064 = vsyncpa [#allocation9], 1
    %1065 = vsyncpa [#allocation4], 1
    %s1066 = scalar_lea.sflag [#allocation4], 1
    %1067 = vsyncpa %s1066, 1

// kernel: tpu_custom_call.1
$region0: #{tpu_custom_call.1}
  #allocation0 [shape = 'u32[]', space=smem, size = 0x4, offset = 0x4, fixed_abs, tag = 'smem constant byte address 0x4 - core index']
  #allocation1 [shape = 'u32[144,128]{1,0:T(1,128)}', space=vmem, size = 0x12000, scoped, tag = 'internal scratch']
  %s0 = inlined_call_operand.hbm [shape: f32[64,128], index: 0, kind: input, shape index: {}]
  %s1 = inlined_call_operand.hbm [shape: bf16[128,128], index: 1, kind: input, shape index: {}]
  %s2 = inlined_call_operand.vmem [shape: f32[1,128], index: 2, kind: input, shape index: {}]
  %s3 = inlined_call_operand.vmem [shape: f32[1,128], index: 3, kind: input, shape index: {}]
  %s4 = inlined_call_operand.vmem [shape: f32[1,128], index: 4, kind: input, shape index: {}]
  %s5 = inlined_call_operand.hbm [shape: bf16[128,128], index: 5, kind: input, shape index: {}]
  %s6 = inlined_call_operand.vmem [shape: f32[1,128], index: 6, kind: input, shape index: {}]
  %s7 = inlined_call_operand.vmem [shape: f32[1,128], index: 7, kind: input, shape index: {}]
  %s8 = inlined_call_operand.vmem [shape: f32[1,128], index: 8, kind: input, shape index: {}]
  %s9 = inlined_call_operand.hbm [shape: bf16[128,128], index: 9, kind: input, shape index: {}]
  %s10 = inlined_call_operand.vmem [shape: f32[1,128], index: 10, kind: input, shape index: {}]
  %s11 = inlined_call_operand.hbm [shape: f32[64,128], index: 11, kind: output, shape index: {}]
  %s12 = sld [smem:[#allocation0]]
  $region93: #{tpu_custom_call.1} parent=0
    _
  %s14 = ssub.s32 1, %s12
  %s15 = scalar_select 0, %s14, %s12
  $region1: #{tpu_custom_call.1} parent=0
    #allocation2 [shape = 'u8[32768]{0}', space=vmem, size = 0x8000, scoped, tag = 'input window, operand 0']
    #allocation3 [shape = 's32[2]{0}', space=sflag, size = 0x8, scoped, tag = 'scoped memory for tpu_custom_call.1']
    #allocation4 [shape = 's32[2]{0}', space=sflag, size = 0x8, scoped, tag = 'scoped memory for tpu_custom_call.1']
    #allocation5 [shape = 'u8[32768]{0}', space=vmem, size = 0x8000, scoped, tag = 'input window, operand 1, single buffered']
    #allocation6 [shape = 's32[1]{0}', space=sflag, size = 0x4, scoped, tag = 'scoped memory for tpu_custom_call.1']
    #allocation7 [shape = 'u8[32768]{0}', space=vmem, size = 0x8000, scoped, tag = 'input window, operand 5, single buffered']
    #allocation8 [shape = 'u8[32768]{0}', space=vmem, size = 0x8000, scoped, tag = 'input window, operand 9, single buffered']
    #allocation9 [shape = 's32[1]{0}', space=sflag, size = 0x4, scoped, tag = 'scoped memory for tpu_custom_call.1']
    #allocation10 [shape = 'u8[32768]{0}', space=vmem, size = 0x8000, scoped, tag = 'output window, operand 0']
    %16 = vsyncpa [#allocation3], 0
    %s17 = scalar_lea.sflag [#allocation3], 1
    %18 = vsyncpa %s17, 0
    %19 = vsyncpa [#allocation6], 0
    %20 = vsyncpa [#allocation9], 0
    %21 = vsyncpa [#allocation4], 0
    %s22 = scalar_lea.sflag [#allocation4], 1
    %23 = vsyncpa %s22, 0
    loop: start=0, step=1, limit=4
    $region2: #{tpu_custom_call.1} parent=1 // loop_pre_header
      _
    $region3: #{tpu_custom_call.1} parent=1 // loop_header
      %s25 = sphi 0, %s29
      %p26 = scmp.ge.s32.totalorder %s25, 4
      %s35 = sphi 0, %s37
      %s38 = sphi 0, %s35
      %s39 = sphi 0, %s38
      %s55 = sphi 0, %s39
      %s59 = sphi 0, %s59
      %s61 = sphi 0, %s59
      %s62 = sphi 0, %s61
      %s76 = sphi 0, %s62
      %s80 = sphi 0, %s80
      %s82 = sphi 0, %s80
      %s83 = sphi 0, %s82
      %s97 = sphi 0, %s83
      %s101 = sphi 0, %s101
      %s103 = sphi 0, %s101
      %s104 = sphi 0, %s103
      %s118 = sphi 0, %s104
      %s122 = sphi 0, %s122
      %s124 = sphi 0, %s122
      %s125 = sphi 0, %s124
      %s139 = sphi 0, %s125
      %s143 = sphi 0, %s143
      %s145 = sphi 0, %s143
      %s146 = sphi 0, %s145
      %s160 = sphi 0, %s146
      %s164 = sphi 0, %s164
      %s166 = sphi 0, %s164
      %s167 = sphi 0, %s166
      %s181 = sphi 0, %s167
      %s185 = sphi 0, %s185
      %s187 = sphi 0, %s185
      %s188 = sphi 0, %s187
      %s202 = sphi 0, %s188
      %s206 = sphi 0, %s206
      %s208 = sphi 0, %s206
      %s209 = sphi 0, %s208
      %s223 = sphi 0, %s209
      %s227 = sphi 0, %s227
      %s229 = sphi 0, %s227
      %s230 = sphi 0, %s229
      %s244 = sphi 0, %s230
      %s248 = sphi 0, %s248
      %s250 = sphi 0, %s248
      %s251 = sphi 0, %s250
      %s265 = sphi 0, %s251
      %s271 = sphi 0, %s273
      %s274 = sphi 0, %s271
      %s275 = sphi 0, %s274
      %s291 = sphi 0, %s275
    $region4: #{tpu_custom_call.1} parent=1 // loop_header_branch
      %28 = sbr.rel (%p26) target = $region8
    $region5: #{tpu_custom_call.1} parent=1 // loop_body
      %s30 = ssub.s32 %s25, 1
      %s31 = ssub.s32 %s25, 2
      %s32 = sadd.s32 %s25, 1
      %s33 = ssub.s32 %s25, %s32
      %p34 = scmp.eq.s32.totalorder %s33, 0
      %s36 = sadd.s32 %s35, 1
      %s37 = scalar_select %p34, %s35, %s36
      %p40 = pneg %p34
      %p41 = scmp.eq.s32.totalorder %s25, 1
      %p42 = por %p40, %p41
      %p43 = scmp.ne.s32.totalorder %s35, %s38
      %p44 = scmp.eq.s32.totalorder %s25, 0
      %p45 = por %p43, %p44
      %p46 = scmp.ne.s32.totalorder %s35, %s38
      %p47 = scmp.eq.s32.totalorder %s30, 1
      %p48 = por %p46, %p47
      %p49 = scmp.ne.s32.totalorder %s38, %s39
      %p50 = scmp.eq.s32.totalorder %s30, 0
      %p51 = por %p49, %p50
      %p52 = scmp.ne.s32.totalorder %s38, %s39
      %p53 = scmp.eq.s32.totalorder %s31, 1
      %p54 = por %p52, %p53
      %p56 = scmp.ne.s32.totalorder %s39, %s55
      %p57 = scmp.eq.s32.totalorder %s31, 0
      %p58 = por %p56, %p57
      %s60 = sadd.s32 %s59, 1
      %p63 = scmp.eq.s32.totalorder %s25, 1
      %p64 = scmp.ne.s32.totalorder %s59, %s61
      %p65 = scmp.eq.s32.totalorder %s25, 0
      %p66 = por %p64, %p65
      %p67 = scmp.ne.s32.totalorder %s59, %s61
      %p68 = scmp.eq.s32.totalorder %s30, 1
      %p69 = por %p67, %p68
      %p70 = scmp.ne.s32.totalorder %s61, %s62
      %p71 = scmp.eq.s32.totalorder %s30, 0
      %p72 = por %p70, %p71
      %p73 = scmp.ne.s32.totalorder %s61, %s62
      %p74 = scmp.eq.s32.totalorder %s31, 1
      %p75 = por %p73, %p74
      %p77 = scmp.ne.s32.totalorder %s62, %s76
      %p78 = scmp.eq.s32.totalorder %s31, 0
      %p79 = por %p77, %p78
      %s81 = sadd.s32 %s80, 1
      %p84 = scmp.eq.s32.totalorder %s25, 1
      %p85 = scmp.ne.s32.totalorder %s80, %s82
      %p86 = scmp.eq.s32.totalorder %s25, 0
      %p87 = por %p85, %p86
      %p88 = scmp.ne.s32.totalorder %s80, %s82
      %p89 = scmp.eq.s32.totalorder %s30, 1
      %p90 = por %p88, %p89
      %p91 = scmp.ne.s32.totalorder %s82, %s83
      %p92 = scmp.eq.s32.totalorder %s30, 0
      %p93 = por %p91, %p92
      %p94 = scmp.ne.s32.totalorder %s82, %s83
      %p95 = scmp.eq.s32.totalorder %s31, 1
      %p96 = por %p94, %p95
      %p98 = scmp.ne.s32.totalorder %s83, %s97
      %p99 = scmp.eq.s32.totalorder %s31, 0
      %p100 = por %p98, %p99
      %s102 = sadd.s32 %s101, 1
      %p105 = scmp.eq.s32.totalorder %s25, 1
      %p106 = scmp.ne.s32.totalorder %s101, %s103
      %p107 = scmp.eq.s32.totalorder %s25, 0
      %p108 = por %p106, %p107
      %p109 = scmp.ne.s32.totalorder %s101, %s103
      %p110 = scmp.eq.s32.totalorder %s30, 1
      %p111 = por %p109, %p110
      %p112 = scmp.ne.s32.totalorder %s103, %s104
      %p113 = scmp.eq.s32.totalorder %s30, 0
      %p114 = por %p112, %p113
      %p115 = scmp.ne.s32.totalorder %s103, %s104
      %p116 = scmp.eq.s32.totalorder %s31, 1
      %p117 = por %p115, %p116
      %p119 = scmp.ne.s32.totalorder %s104, %s118
      %p120 = scmp.eq.s32.totalorder %s31, 0
      %p121 = por %p119, %p120
      %s123 = sadd.s32 %s122, 1
      %p126 = scmp.eq.s32.totalorder %s25, 1
      %p127 = scmp.ne.s32.totalorder %s122, %s124
      %p128 = scmp.eq.s32.totalorder %s25, 0
      %p129 = por %p127, %p128
      %p130 = scmp.ne.s32.totalorder %s122, %s124
      %p131 = scmp.eq.s32.totalorder %s30, 1
      %p132 = por %p130, %p131
      %p133 = scmp.ne.s32.totalorder %s124, %s125
      %p134 = scmp.eq.s32.totalorder %s30, 0
      %p135 = por %p133, %p134
      %p136 = scmp.ne.s32.totalorder %s124, %s125
      %p137 = scmp.eq.s32.totalorder %s31, 1
      %p138 = por %p136, %p137
      %p140 = scmp.ne.s32.totalorder %s125, %s139
      %p141 = scmp.eq.s32.totalorder %s31, 0
      %p142 = por %p140, %p141
      %s144 = sadd.s32 %s143, 1
      %p147 = scmp.eq.s32.totalorder %s25, 1
      %p148 = scmp.ne.s32.totalorder %s143, %s145
      %p149 = scmp.eq.s32.totalorder %s25, 0
      %p150 = por %p148, %p149
      %p151 = scmp.ne.s32.totalorder %s143, %s145
      %p152 = scmp.eq.s32.totalorder %s30, 1
      %p153 = por %p151, %p152
      %p154 = scmp.ne.s32.totalorder %s145, %s146
      %p155 = scmp.eq.s32.totalorder %s30, 0
      %p156 = por %p154, %p155
      %p157 = scmp.ne.s32.totalorder %s145, %s146
      %p158 = scmp.eq.s32.totalorder %s31, 1
      %p159 = por %p157, %p158
      %p161 = scmp.ne.s32.totalorder %s146, %s160
      %p162 = scmp.eq.s32.totalorder %s31, 0
      %p163 = por %p161, %p162
      %s165 = sadd.s32 %s164, 1
      %p168 = scmp.eq.s32.totalorder %s25, 1
      %p169 = scmp.ne.s32.totalorder %s164, %s166
      %p170 = scmp.eq.s32.totalorder %s25, 0
      %p171 = por %p169, %p170
      %p172 = scmp.ne.s32.totalorder %s164, %s166
      %p173 = scmp.eq.s32.totalorder %s30, 1
      %p174 = por %p172, %p173
      %p175 = scmp.ne.s32.totalorder %s166, %s167
      %p176 = scmp.eq.s32.totalorder %s30, 0
      %p177 = por %p175, %p176
      %p178 = scmp.ne.s32.totalorder %s166, %s167
      %p179 = scmp.eq.s32.totalorder %s31, 1
      %p180 = por %p178, %p179
      %p182 = scmp.ne.s32.totalorder %s167, %s181
      %p183 = scmp.eq.s32.totalorder %s31, 0
      %p184 = por %p182, %p183
      %s186 = sadd.s32 %s185, 1
      %p189 = scmp.eq.s32.totalorder %s25, 1
      %p190 = scmp.ne.s32.totalorder %s185, %s187
      %p191 = scmp.eq.s32.totalorder %s25, 0
      %p192 = por %p190, %p191
      %p193 = scmp.ne.s32.totalorder %s185, %s187
      %p194 = scmp.eq.s32.totalorder %s30, 1
      %p195 = por %p193, %p194
      %p196 = scmp.ne.s32.totalorder %s187, %s188
      %p197 = scmp.eq.s32.totalorder %s30, 0
      %p198 = por %p196, %p197
      %p199 = scmp.ne.s32.totalorder %s187, %s188
      %p200 = scmp.eq.s32.totalorder %s31, 1
      %p201 = por %p199, %p200
      %p203 = scmp.ne.s32.totalorder %s188, %s202
      %p204 = scmp.eq.s32.totalorder %s31, 0
      %p205 = por %p203, %p204
      %s207 = sadd.s32 %s206, 1
      %p210 = scmp.eq.s32.totalorder %s25, 1
      %p211 = scmp.ne.s32.totalorder %s206, %s208
      %p212 = scmp.eq.s32.totalorder %s25, 0
      %p213 = por %p211, %p212
      %p214 = scmp.ne.s32.totalorder %s206, %s208
      %p215 = scmp.eq.s32.totalorder %s30, 1
      %p216 = por %p214, %p215
      %p217 = scmp.ne.s32.totalorder %s208, %s209
      %p218 = scmp.eq.s32.totalorder %s30, 0
      %p219 = por %p217, %p218
      %p220 = scmp.ne.s32.totalorder %s208, %s209
      %p221 = scmp.eq.s32.totalorder %s31, 1
      %p222 = por %p220, %p221
      %p224 = scmp.ne.s32.totalorder %s209, %s223
      %p225 = scmp.eq.s32.totalorder %s31, 0
      %p226 = por %p224, %p225
      %s228 = sadd.s32 %s227, 1
      %p231 = scmp.eq.s32.totalorder %s25, 1
      %p232 = scmp.ne.s32.totalorder %s227, %s229
      %p233 = scmp.eq.s32.totalorder %s25, 0
      %p234 = por %p232, %p233
      %p235 = scmp.ne.s32.totalorder %s227, %s229
      %p236 = scmp.eq.s32.totalorder %s30, 1
      %p237 = por %p235, %p236
      %p238 = scmp.ne.s32.totalorder %s229, %s230
      %p239 = scmp.eq.s32.totalorder %s30, 0
      %p240 = por %p238, %p239
      %p241 = scmp.ne.s32.totalorder %s229, %s230
      %p242 = scmp.eq.s32.totalorder %s31, 1
      %p243 = por %p241, %p242
      %p245 = scmp.ne.s32.totalorder %s230, %s244
      %p246 = scmp.eq.s32.totalorder %s31, 0
      %p247 = por %p245, %p246
      %s249 = sadd.s32 %s248, 1
      %p252 = scmp.eq.s32.totalorder %s25, 1
      %p253 = scmp.ne.s32.totalorder %s248, %s250
      %p254 = scmp.eq.s32.totalorder %s25, 0
      %p255 = por %p253, %p254
      %p256 = scmp.ne.s32.totalorder %s248, %s250
      %p257 = scmp.eq.s32.totalorder %s30, 1
      %p258 = por %p256, %p257
      %p259 = scmp.ne.s32.totalorder %s250, %s251
      %p260 = scmp.eq.s32.totalorder %s30, 0
      %p261 = por %p259, %p260
      %p262 = scmp.ne.s32.totalorder %s250, %s251
      %p263 = scmp.eq.s32.totalorder %s31, 1
      %p264 = por %p262, %p263
      %p266 = scmp.ne.s32.totalorder %s251, %s265
      %p267 = scmp.eq.s32.totalorder %s31, 0
      %p268 = por %p266, %p267
      %s269 = ssub.s32 %s25, %s32
      %p270 = scmp.eq.s32.totalorder %s269, 0
      %s272 = sadd.s32 %s271, 1
      %s273 = scalar_select %p270, %s271, %s272
      %p276 = pneg %p270
      %p277 = scmp.eq.s32.totalorder %s25, 1
      %p278 = por %p276, %p277
      %p279 = scmp.ne.s32.totalorder %s271, %s274
      %p280 = scmp.eq.s32.totalorder %s25, 0
      %p281 = por %p279, %p280
      %p282 = scmp.ne.s32.totalorder %s271, %s274
      %p283 = scmp.eq.s32.totalorder %s30, 1
      %p284 = por %p282, %p283
      %p285 = scmp.ne.s32.totalorder %s274, %s275
      %p286 = scmp.eq.s32.totalorder %s30, 0
      %p287 = por %p285, %p286
      %p288 = scmp.ne.s32.totalorder %s274, %s275
      %p289 = scmp.eq.s32.totalorder %s31, 1
      %p290 = por %p288, %p289
      %p292 = scmp.ne.s32.totalorder %s275, %s291
      %p293 = scmp.eq.s32.totalorder %s31, 0
      %p294 = por %p292, %p293
      %p295 = scmp.le.s32.totalorder 1, %s25
      %p296 = scmp.lt.s32.totalorder %s25, 3
      %p297 = pnand %p295, %p296
      %p298 = pneg %p297
      // Predicated region
      $region9: #{tpu_custom_call.1} parent=5 // pred_check
        _
      $region10: #{tpu_custom_call.1} parent=5 // pred_check_branch
        %300 = sbr.rel (%p297) target = $region12
      $region11: #{tpu_custom_call.1} parent=5 // pred_region
        %s301 = ssub.s32 %s25, 1
        // Predicated region
        $region13: #{tpu_custom_call.1} parent=11 // pred_check
          %p302 = pneg %p72
        $region14: #{tpu_custom_call.1} parent=11 // pred_check_branch
          %304 = sbr.rel (%p302) target = $region16
        $region15: #{tpu_custom_call.1} parent=11 // pred_region
          %s306 = ssub.s32 1024, 1024
          %307 = vsyncadd [#allocation6], %s306
          %s308 = sshll.u32 [#allocation5], 4
          %s309 = int_to_ptr.vmem [resolvable:$true] %s308
          %314 = dma.hbm_to_vmem [thread:$0]  %s1, 1024, %s309, [#allocation6], 64, 64, 4
        $region16: #{tpu_custom_call.1} parent=11 // pred_fallthru
          _
        // Predicated region
        $region17: #{tpu_custom_call.1} parent=11 // pred_check
          %p315 = pneg %p93
        $region18: #{tpu_custom_call.1} parent=11 // pred_check_branch
          %317 = sbr.rel (%p315) target = $region20
        $region19: #{tpu_custom_call.1} parent=11 // pred_region
          _
        $region20: #{tpu_custom_call.1} parent=11 // pred_fallthru
          _
        // Predicated region
        $region21: #{tpu_custom_call.1} parent=11 // pred_check
          %p318 = pneg %p114
        $region22: #{tpu_custom_call.1} parent=11 // pred_check_branch
          %320 = sbr.rel (%p318) target = $region24
        $region23: #{tpu_custom_call.1} parent=11 // pred_region
          _
        $region24: #{tpu_custom_call.1} parent=11 // pred_fallthru
          _
        // Predicated region
        $region25: #{tpu_custom_call.1} parent=11 // pred_check
          %p321 = pneg %p135
        $region26: #{tpu_custom_call.1} parent=11 // pred_check_branch
          %323 = sbr.rel (%p321) target = $region28
        $region27: #{tpu_custom_call.1} parent=11 // pred_region
          _
        $region28: #{tpu_custom_call.1} parent=11 // pred_fallthru
          _
        // Predicated region
        $region29: #{tpu_custom_call.1} parent=11 // pred_check
          %p324 = pneg %p156
        $region30: #{tpu_custom_call.1} parent=11 // pred_check_branch
          %326 = sbr.rel (%p324) target = $region32
        $region31: #{tpu_custom_call.1} parent=11 // pred_region
          %s328 = ssub.s32 1024, 1024
          %329 = vsyncadd [#allocation6], %s328
          %s330 = sshll.u32 [#allocation7], 4
          %s331 = int_to_ptr.vmem [resolvable:$true] %s330
          %336 = dma.hbm_to_vmem [thread:$0]  %s5, 1024, %s331, [#allocation6], 64, 64, 4
        $region32: #{tpu_custom_call.1} parent=11 // pred_fallthru
          _
        // Predicated region
        $region33: #{tpu_custom_call.1} parent=11 // pred_check
          %p337 = pneg %p177
        $region34: #{tpu_custom_call.1} parent=11 // pred_check_branch
          %339 = sbr.rel (%p337) target = $region36
        $region35: #{tpu_custom_call.1} parent=11 // pred_region
          _
        $region36: #{tpu_custom_call.1} parent=11 // pred_fallthru
          _
        // Predicated region
        $region37: #{tpu_custom_call.1} parent=11 // pred_check
          %p340 = pneg %p198
        $region38: #{tpu_custom_call.1} parent=11 // pred_check_branch
          %342 = sbr.rel (%p340) target = $region40
        $region39: #{tpu_custom_call.1} parent=11 // pred_region
          _
        $region40: #{tpu_custom_call.1} parent=11 // pred_fallthru
          _
        // Predicated region
        $region41: #{tpu_custom_call.1} parent=11 // pred_check
          %p343 = pneg %p219
        $region42: #{tpu_custom_call.1} parent=11 // pred_check_branch
          %345 = sbr.rel (%p343) target = $region44
        $region43: #{tpu_custom_call.1} parent=11 // pred_region
          _
        $region44: #{tpu_custom_call.1} parent=11 // pred_fallthru
          _
        // Predicated region
        $region45: #{tpu_custom_call.1} parent=11 // pred_check
          %p346 = pneg %p240
        $region46: #{tpu_custom_call.1} parent=11 // pred_check_branch
          %348 = sbr.rel (%p346) target = $region48
        $region47: #{tpu_custom_call.1} parent=11 // pred_region
          %s350 = ssub.s32 1024, 1024
          %351 = vsyncadd [#allocation9], %s350
          %s352 = sshll.u32 [#allocation8], 4
          %s353 = int_to_ptr.vmem [resolvable:$true] %s352
          %358 = dma.hbm_to_vmem [thread:$0]  %s9, 1024, %s353, [#allocation9], 64, 64, 4
        $region48: #{tpu_custom_call.1} parent=11 // pred_fallthru
          _
        // Predicated region
        $region49: #{tpu_custom_call.1} parent=11 // pred_check
          %p359 = pneg %p261
        $region50: #{tpu_custom_call.1} parent=11 // pred_check_branch
          %361 = sbr.rel (%p359) target = $region52
        $region51: #{tpu_custom_call.1} parent=11 // pred_region
          _
        $region52: #{tpu_custom_call.1} parent=11 // pred_fallthru
          _
      $region12: #{tpu_custom_call.1} parent=5 // pred_fallthru
        _
      %p362 = scmp.lt.s32.totalorder %s25, 2
      // Predicated region
      $region53: #{tpu_custom_call.1} parent=5 // pred_check
        %p363 = pneg %p362
      $region54: #{tpu_custom_call.1} parent=5 // pred_check_branch
        %365 = sbr.rel (%p363) target = $region56
      $region55: #{tpu_custom_call.1} parent=5 // pred_region
        // Predicated region
        $region57: #{tpu_custom_call.1} parent=55 // pred_check
          %p366 = pneg %p45
        $region58: #{tpu_custom_call.1} parent=55 // pred_check_branch
          %368 = sbr.rel (%p366) target = $region60
        $region59: #{tpu_custom_call.1} parent=55 // pred_region
          %s369 = sand.u32 %s35, 1
          %s370 = scalar_lea.sflag [#allocation3], %s369
          %s371 = sand.u32 %s35, 1
          %s372 = smul.addr %s371, 32
          %s373 = scalar_lea.vmem [#allocation2], %s372
          %s374 = smul.u32 4, %s25
          %s376 = ssub.s32 512, 512
          %377 = vsyncadd %s370, %s376
          %s378 = smul.addr %s374, 128
          %s379 = scalar_lea.hbm %s0, %s378
          %s380 = sshll.u32 %s373, 4
          %s381 = int_to_ptr.vmem [resolvable:$true] %s380
          %386 = dma.hbm_to_vmem [thread:$0]  %s379, 512, %s381, %s370, 128, 128, 8
        $region60: #{tpu_custom_call.1} parent=55 // pred_fallthru
          _
      $region56: #{tpu_custom_call.1} parent=5 // pred_fallthru
        _
      %p387 = scmp.le.s32.totalorder 1, %s25
      %p388 = scmp.lt.s32.totalorder %s25, 3
      %p389 = pnand %p387, %p388
      %p390 = pneg %p389
      // Predicated region
      $region61: #{tpu_custom_call.1} parent=5 // pred_check
        _
      $region62: #{tpu_custom_call.1} parent=5 // pred_check_branch
        %392 = sbr.rel (%p389) target = $region64
      $region63: #{tpu_custom_call.1} parent=5 // pred_region
        %s393 = ssub.s32 %s25, 1
        %s394 = sand.u32 %s38, 1
        %s395 = scalar_lea.sflag [#allocation3], %s394
        %s396 = sand.u32 %s38, 1
        %s397 = smul.addr %s396, 32
        %s398 = scalar_lea.vmem [#allocation2], %s397
        // Predicated region
        $region65: #{tpu_custom_call.1} parent=63 // pred_check
          %p399 = pneg %p51
        $region66: #{tpu_custom_call.1} parent=63 // pred_check_branch
          %401 = sbr.rel (%p399) target = $region68
        $region67: #{tpu_custom_call.1} parent=63 // pred_region
          %402 = dma.done %s395, 512
        $region68: #{tpu_custom_call.1} parent=63 // pred_fallthru
          _
        // Predicated region
        $region69: #{tpu_custom_call.1} parent=63 // pred_check
          %p403 = pneg %p72
        $region70: #{tpu_custom_call.1} parent=63 // pred_check_branch
          %405 = sbr.rel (%p403) target = $region72
        $region71: #{tpu_custom_call.1} parent=63 // pred_region
          %406 = dma.done [#allocation6], 1024
        $region72: #{tpu_custom_call.1} parent=63 // pred_fallthru
          _
        // Predicated region
        $region73: #{tpu_custom_call.1} parent=63 // pred_check
          %p407 = pneg %p156
        $region74: #{tpu_custom_call.1} parent=63 // pred_check_branch
          %409 = sbr.rel (%p407) target = $region76
        $region75: #{tpu_custom_call.1} parent=63 // pred_region
          %410 = dma.done [#allocation6], 1024
        $region76: #{tpu_custom_call.1} parent=63 // pred_fallthru
          _
        // Predicated region
        $region77: #{tpu_custom_call.1} parent=63 // pred_check
          %p411 = pneg %p240
        $region78: #{tpu_custom_call.1} parent=63 // pred_check_branch
          %413 = sbr.rel (%p411) target = $region80
        $region79: #{tpu_custom_call.1} parent=63 // pred_region
          %414 = dma.done [#allocation9], 1024
        $region80: #{tpu_custom_call.1} parent=63 // pred_fallthru
          _
        %s415 = sand.u32 %s38, 1
        %s416 = scalar_lea.sflag [#allocation3], %s415
        %s417 = sand.u32 %s38, 1
        %s418 = smul.addr %s417, 32
        %s419 = scalar_lea.vmem [#allocation2], %s418
        %p420 = pneg %p51
        %p421 = pneg %p48
        %p422 = pneg %p72
        %p423 = pneg %p69
        %p424 = pneg %p93
        %p425 = pneg %p90
        %p426 = pneg %p114
        %p427 = pneg %p111
        %p428 = pneg %p135
        %p429 = pneg %p132
        %p430 = pneg %p156
        %p431 = pneg %p153
        %p432 = pneg %p177
        %p433 = pneg %p174
        %p434 = pneg %p198
        %p435 = pneg %p195
        %p436 = pneg %p219
        %p437 = pneg %p216
        %p438 = pneg %p240
        %p439 = pneg %p237
        %p440 = pneg %p261
        %p441 = pneg %p258
        %p442 = pneg %p287
        %p443 = pneg %p284
        %s444 = sand.u32 %s274, 1
        %s445 = scalar_lea.sflag [#allocation4], %s444
        %s446 = sand.u32 %s274, 1
        %s447 = smul.addr %s446, 32
        %s448 = scalar_lea.vmem [#allocation10], %s447
        %s449 = smul.u32 4, %s30
        %s450 = smul.u32 4, %s30
        %v452 = vld [vmem:[%s398] sm:$0xff]
        %v453 = vld [vmem:[%s398 + $0x8] sm:$0xff]
        %v454 = vld [vmem:[%s398 + $0x10] sm:$0xff]
        %v455 = vld [vmem:[%s398 + $0x18] sm:$0xff]
        %v456 = vld [vmem:[#allocation5] sm:$0xf]
        %v457 = vld [vmem:[#allocation5 + $0x4] sm:$0xf]
        %v458 = vld [vmem:[#allocation5 + $0x8] sm:$0xf]
        %v459 = vld [vmem:[#allocation5 + $0xc] sm:$0xf]
        %v460 = vld [vmem:[#allocation5 + $0x10] sm:$0xf]
        %v461 = vld [vmem:[#allocation5 + $0x14] sm:$0xf]
        %v462 = vld [vmem:[#allocation5 + $0x18] sm:$0xf]
        %v463 = vld [vmem:[#allocation5 + $0x1c] sm:$0xf]
        %v464 = vld [vmem:[#allocation5 + $0x20] sm:$0xf]
        %v465 = vld [vmem:[#allocation5 + $0x24] sm:$0xf]
        %v466 = vld [vmem:[#allocation5 + $0x28] sm:$0xf]
        %v467 = vld [vmem:[#allocation5 + $0x2c] sm:$0xf]
        %v468 = vld [vmem:[#allocation5 + $0x30] sm:$0xf]
        %v469 = vld [vmem:[#allocation5 + $0x34] sm:$0xf]
        %v470 = vld [vmem:[#allocation5 + $0x38] sm:$0xf]
        %v471 = vld [vmem:[#allocation5 + $0x3c] sm:$0xf]
        %v472 = vpack.c.bf16 %v453, %v452
        %v473 = vpack.c.bf16 %v455, %v454
        %v474 = vld [vmem:[%s2] sm:$0x1]
        %v476 = vlaneseq
        %v477 = vshrl.u32 %v476, 7
        %v478 = vsub.s32 0, %v477
        %v479 = vrot.slane %v474, %v478
        %v497 = vunpack.c.l.b16 %v456
        %v498 = vunpack.c.l.b16 %v457
        %v499 = vunpack.c.l.b16 %v458
        %v500 = vunpack.c.l.b16 %v459
        %v501 = vunpack.c.l.b16 %v460
        %v502 = vunpack.c.l.b16 %v461
        %v503 = vunpack.c.l.b16 %v462
        %v504 = vunpack.c.l.b16 %v463
        %v505 = vunpack.c.l.b16 %v464
        %v506 = vunpack.c.l.b16 %v465
        %v507 = vunpack.c.l.b16 %v466
        %v508 = vunpack.c.l.b16 %v467
        %v509 = vunpack.c.l.b16 %v468
        %v510 = vunpack.c.l.b16 %v469
        %v511 = vunpack.c.l.b16 %v470
        %v512 = vunpack.c.l.b16 %v471
        %v513 = vpack.c.b16 %v498, %v497
        %v514 = vpack.c.b16 %v500, %v499
        %v515 = vpack.c.b16 %v502, %v501
        %v516 = vpack.c.b16 %v504, %v503
        %v517 = vpack.c.b16 %v506, %v505
        %v518 = vpack.c.b16 %v508, %v507
        %v519 = vpack.c.b16 %v510, %v509
        %v520 = vpack.c.b16 %v512, %v511
        %529 = vmatprep.subr.bf16.mxu0 0
        %530 = vmatpush1.bf16.msra.mxu0 %v520
        %531 = vmatprep.subr.bf16.mxu0 0
        %532 = vmatpush1.bf16.msra.mxu0 %v519
        %533 = vmatprep.subr.bf16.mxu0 0
        %534 = vmatpush1.bf16.msra.mxu0 %v518
        %535 = vmatprep.subr.bf16.mxu0 0
        %536 = vmatpush1.bf16.msra.mxu0 %v517
        %537 = vmatprep.subr.bf16.mxu0 0
        %538 = vmatpush1.bf16.msra.mxu0 %v516
        %539 = vmatprep.subr.bf16.mxu0 0
        %540 = vmatpush1.bf16.msra.mxu0 %v515
        %541 = vmatprep.subr.bf16.mxu0 0
        %542 = vmatpush1.bf16.msra.mxu0 %v514
        %543 = vmatprep.subr.bf16.mxu0 0
        %544 = vmatpush1.bf16.msra.mxu0 %v513
        %545 = vmatprep.subr.bf16.mxu0 0
        %546 = vmatpush2.bf16.msra.mxu0 0
        %547 = vmatprep.subr.bf16.mxu0 0
        %548 = vmatpush2.bf16.msra.mxu0 0
        %549 = vmatprep.subr.bf16.mxu0 0
        %550 = vmatpush2.bf16.msra.mxu0 0
        %551 = vmatprep.subr.bf16.mxu0 0
        %552 = vmatpush2.bf16.msra.mxu0 0
        %553 = vmatprep.subr.bf16.mxu0 0
        %554 = vmatpush2.bf16.msra.mxu0 0
        %555 = vmatprep.subr.bf16.mxu0 0
        %556 = vmatpush2.bf16.msra.mxu0 0
        %557 = vmatprep.subr.bf16.mxu0 0
        %558 = vmatpush2.bf16.msra.mxu0 0
        %559 = vmatprep.subr.bf16.mxu0 0
        %560 = vmatpush2.bf16.msra.mxu0 0
        %561 = vmatprep.mubr.bf16.mxu0 0
        %562 = vmatmul.mubr.bf16.gmra.mxu0 %v472
        %v563 = vpop.f32.mrf.mxu0
        %v564 = vadd.f32 %v479, %v563
        %v565 = vpop.f32.mrf.mxu0
        %v566 = vpop.f32.mrf.mxu0
        %v567 = vadd.f32 %v479, %v566
        %v568 = vpop.f32.mrf.mxu0
        %569 = vmatprep.mubr.bf16.mxu0 0
        %570 = vmatmul.mubr.bf16.gmra.mxu0 %v473
        %v571 = vpop.f32.mrf.mxu0
        %v572 = vadd.f32 %v479, %v571
        %v573 = vpop.f32.mrf.mxu0
        %v574 = vpop.f32.mrf.mxu0
        %v575 = vadd.f32 %v479, %v574
        %v576 = vpop.f32.mrf.mxu0
        %577 = vdwg.mxu0
        %578 = vadd.xlane.f32.xlu0 %v564
        %v579 = vpop.xlane.xlu0 %578
        %580 = vadd.xlane.f32.xlu0 %v567
        %v581 = vpop.xlane.xlu0 %580
        %582 = vadd.xlane.f32.xlu0 %v572
        %v583 = vpop.xlane.xlu0 %582
        %584 = vadd.xlane.f32.xlu0 %v575
        %v585 = vpop.xlane.xlu0 %584
        %v586 = vmul.f32 %v579, 0.03125
        %v587 = vmul.f32 %v581, 0.03125
        %v588 = vmul.f32 %v583, 0.03125
        %v589 = vmul.f32 %v585, 0.03125
        %v590 = vsub.f32 %v564, %v586
        %v591 = vsub.f32 %v567, %v587
        %v592 = vsub.f32 %v572, %v588
        %v593 = vsub.f32 %v575, %v589
        %v594 = vlaneseq
        %v595 = vand.u32 %v594, 127
        %vm596 = vcmp.lt.s32.totalorder %v595, 32
        %v597 = vsel %vm596, %v590, 0.0
        %v598 = vsel %vm596, %v591, 0.0
        %v599 = vsel %vm596, %v592, 0.0
        %v600 = vsel %vm596, %v593, 0.0
        %v601 = vmul.f32 %v597, %v597
        %v602 = vmul.f32 %v598, %v598
        %v603 = vmul.f32 %v599, %v599
        %v604 = vmul.f32 %v600, %v600
        %605 = vadd.xlane.f32.xlu0 %v601
        %v606 = vpop.xlane.xlu0 %605
        %607 = vadd.xlane.f32.xlu0 %v602
        %v608 = vpop.xlane.xlu0 %607
        %609 = vadd.xlane.f32.xlu0 %v603
        %v610 = vpop.xlane.xlu0 %609
        %611 = vadd.xlane.f32.xlu0 %v604
        %v612 = vpop.xlane.xlu0 %611
        %v613 = vmul.f32 %v606, 0.03125
        %v614 = vmul.f32 %v608, 0.03125
        %v615 = vmul.f32 %v610, 0.03125
        %v616 = vmul.f32 %v612, 0.03125
        %v617 = vadd.f32 %v613, 1e-05
        %v618 = vadd.f32 %v614, 1e-05
        %v619 = vadd.f32 %v615, 1e-05
        %v620 = vadd.f32 %v616, 1e-05
        %v621 = vrsqrt.pop %v617
        %v622 = vrsqrt.pop %v618
        %v623 = vrsqrt.pop %v619
        %v624 = vrsqrt.pop %v620
        %v625 = vmul.f32 %v597, %v621
        %v626 = vmul.f32 %v598, %v622
        %v627 = vmul.f32 %v599, %v623
        %v628 = vmul.f32 %v600, %v624
        %v629 = vld [vmem:[%s3] sm:$0x1]
        %v631 = vlaneseq
        %v632 = vshrl.u32 %v631, 7
        %v633 = vsub.s32 0, %v632
        %v634 = vrot.slane %v629, %v633
        %v636 = vmul.f32 %v625, %v634
        %v637 = vmul.f32 %v626, %v634
        %v638 = vmul.f32 %v627, %v634
        %v639 = vmul.f32 %v628, %v634
        %v640 = vld [vmem:[%s4] sm:$0x1]
        %v642 = vlaneseq
        %v643 = vshrl.u32 %v642, 7
        %v644 = vsub.s32 0, %v643
        %v645 = vrot.slane %v640, %v644
        %v647 = vadd.f32 %v636, %v645
        %v648 = vadd.f32 %v637, %v645
        %v649 = vadd.f32 %v638, %v645
        %v650 = vadd.f32 %v639, %v645
        %v651 = vxor.u32 %v647, 2147483648
        %v652 = vxor.u32 %v648, 2147483648
        %v653 = vxor.u32 %v649, 2147483648
        %v654 = vxor.u32 %v650, 2147483648
        %v655 = vmul.f32 %v651, 1.442695
        %v656 = vpow.pop %v655
        %v657 = vmul.f32 %v652, 1.442695
        %v658 = vpow.pop %v657
        %v659 = vmul.f32 %v653, 1.442695
        %v660 = vpow.pop %v659
        %v661 = vmul.f32 %v654, 1.442695
        %v662 = vpow.pop %v661
        %v663 = vadd.f32 %v656, 1.0
        %v664 = vadd.f32 %v658, 1.0
        %v665 = vadd.f32 %v660, 1.0
        %v666 = vadd.f32 %v662, 1.0
        %v667 = vrcp.pop %v663
        %v668 = vmul.f32 1.0, %v667
        %v669 = vrcp.pop %v664
        %v670 = vmul.f32 1.0, %v669
        %v671 = vrcp.pop %v665
        %v672 = vmul.f32 1.0, %v671
        %v673 = vrcp.pop %v666
        %v674 = vmul.f32 1.0, %v673
        %v675 = vmul.f32 %v647, %v668
        %v676 = vmul.f32 %v648, %v670
        %v677 = vmul.f32 %v649, %v672
        %v678 = vmul.f32 %v650, %v674
        %v679 = vld [vmem:[#allocation7] sm:$0xf]
        %v680 = vld [vmem:[#allocation7 + $0x4] sm:$0xf]
        %v681 = vld [vmem:[#allocation7 + $0x8] sm:$0xf]
        %v682 = vld [vmem:[#allocation7 + $0xc] sm:$0xf]
        %v683 = vld [vmem:[#allocation7 + $0x10] sm:$0xf]
        %v684 = vld [vmem:[#allocation7 + $0x14] sm:$0xf]
        %v685 = vld [vmem:[#allocation7 + $0x18] sm:$0xf]
        %v686 = vld [vmem:[#allocation7 + $0x1c] sm:$0xf]
        %v687 = vld [vmem:[#allocation7 + $0x20] sm:$0xf]
        %v688 = vld [vmem:[#allocation7 + $0x24] sm:$0xf]
        %v689 = vld [vmem:[#allocation7 + $0x28] sm:$0xf]
        %v690 = vld [vmem:[#allocation7 + $0x2c] sm:$0xf]
        %v691 = vld [vmem:[#allocation7 + $0x30] sm:$0xf]
        %v692 = vld [vmem:[#allocation7 + $0x34] sm:$0xf]
        %v693 = vld [vmem:[#allocation7 + $0x38] sm:$0xf]
        %v694 = vld [vmem:[#allocation7 + $0x3c] sm:$0xf]
        %v695 = vpack.c.bf16 %v676, %v675
        %v696 = vpack.c.bf16 %v678, %v677
        %v697 = vld [vmem:[%s6] sm:$0x1]
        %v699 = vlaneseq
        %v700 = vshrl.u32 %v699, 7
        %v701 = vsub.s32 0, %v700
        %v702 = vrot.slane %v697, %v701
        %v720 = vunpack.c.l.b16 %v679
        %v721 = vunpack.c.l.b16 %v680
        %v722 = vunpack.c.l.b16 %v681
        %v723 = vunpack.c.l.b16 %v682
        %v724 = vunpack.c.l.b16 %v683
        %v725 = vunpack.c.l.b16 %v684
        %v726 = vunpack.c.l.b16 %v685
        %v727 = vunpack.c.l.b16 %v686
        %v728 = vunpack.c.l.b16 %v687
        %v729 = vunpack.c.l.b16 %v688
        %v730 = vunpack.c.l.b16 %v689
        %v731 = vunpack.c.l.b16 %v690
        %v732 = vunpack.c.l.b16 %v691
        %v733 = vunpack.c.l.b16 %v692
        %v734 = vunpack.c.l.b16 %v693
        %v735 = vunpack.c.l.b16 %v694
        %v736 = vpack.c.b16 %v721, %v720
        %v737 = vpack.c.b16 %v723, %v722
        %v738 = vpack.c.b16 %v725, %v724
        %v739 = vpack.c.b16 %v727, %v726
        %v740 = vpack.c.b16 %v729, %v728
        %v741 = vpack.c.b16 %v731, %v730
        %v742 = vpack.c.b16 %v733, %v732
        %v743 = vpack.c.b16 %v735, %v734
        %752 = vmatprep.subr.bf16.mxu0 0
        %753 = vmatpush1.bf16.msra.mxu0 %v743
        %754 = vmatprep.subr.bf16.mxu0 0
        %755 = vmatpush1.bf16.msra.mxu0 %v742
        %756 = vmatprep.subr.bf16.mxu0 0
        %757 = vmatpush1.bf16.msra.mxu0 %v741
        %758 = vmatprep.subr.bf16.mxu0 0
        %759 = vmatpush1.bf16.msra.mxu0 %v740
        %760 = vmatprep.subr.bf16.mxu0 0
        %761 = vmatpush1.bf16.msra.mxu0 %v739
        %762 = vmatprep.subr.bf16.mxu0 0
        %763 = vmatpush1.bf16.msra.mxu0 %v738
        %764 = vmatprep.subr.bf16.mxu0 0
        %765 = vmatpush1.bf16.msra.mxu0 %v737
        %766 = vmatprep.subr.bf16.mxu0 0
        %767 = vmatpush1.bf16.msra.mxu0 %v736
        %768 = vmatprep.subr.bf16.mxu0 0
        %769 = vmatpush2.bf16.msra.mxu0 0
        %770 = vmatprep.subr.bf16.mxu0 0
        %771 = vmatpush2.bf16.msra.mxu0 0
        %772 = vmatprep.subr.bf16.mxu0 0
        %773 = vmatpush2.bf16.msra.mxu0 0
        %774 = vmatprep.subr.bf16.mxu0 0
        %775 = vmatpush2.bf16.msra.mxu0 0
        %776 = vmatprep.subr.bf16.mxu0 0
        %777 = vmatpush2.bf16.msra.mxu0 0
        %778 = vmatprep.subr.bf16.mxu0 0
        %779 = vmatpush2.bf16.msra.mxu0 0
        %780 = vmatprep.subr.bf16.mxu0 0
        %781 = vmatpush2.bf16.msra.mxu0 0
        %782 = vmatprep.subr.bf16.mxu0 0
        %783 = vmatpush2.bf16.msra.mxu0 0
        %784 = vmatprep.mubr.bf16.mxu0 0
        %785 = vmatmul.mubr.bf16.gmra.mxu0 %v695
        %v786 = vpop.f32.mrf.mxu0
        %v787 = vadd.f32 %v702, %v786
        %v788 = vpop.f32.mrf.mxu0
        %v789 = vpop.f32.mrf.mxu0
        %v790 = vadd.f32 %v702, %v789
        %v791 = vpop.f32.mrf.mxu0
        %792 = vmatprep.mubr.bf16.mxu0 0
        %793 = vmatmul.mubr.bf16.gmra.mxu0 %v696
        %v794 = vpop.f32.mrf.mxu0
        %v795 = vadd.f32 %v702, %v794
        %v796 = vpop.f32.mrf.mxu0
        %v797 = vpop.f32.mrf.mxu0
        %v798 = vadd.f32 %v702, %v797
        %v799 = vpop.f32.mrf.mxu0
        %800 = vdwg.mxu0
        %801 = vadd.xlane.f32.xlu0 %v787
        %v802 = vpop.xlane.xlu0 %801
        %803 = vadd.xlane.f32.xlu0 %v790
        %v804 = vpop.xlane.xlu0 %803
        %805 = vadd.xlane.f32.xlu0 %v795
        %v806 = vpop.xlane.xlu0 %805
        %807 = vadd.xlane.f32.xlu0 %v798
        %v808 = vpop.xlane.xlu0 %807
        %v809 = vmul.f32 %v802, 0.03125
        %v810 = vmul.f32 %v804, 0.03125
        %v811 = vmul.f32 %v806, 0.03125
        %v812 = vmul.f32 %v808, 0.03125
        %v813 = vsub.f32 %v787, %v809
        %v814 = vsub.f32 %v790, %v810
        %v815 = vsub.f32 %v795, %v811
        %v816 = vsub.f32 %v798, %v812
        %v817 = vsel %vm596, %v813, 0.0
        %v818 = vsel %vm596, %v814, 0.0
        %v819 = vsel %vm596, %v815, 0.0
        %v820 = vsel %vm596, %v816, 0.0
        %v821 = vmul.f32 %v817, %v817
        %v822 = vmul.f32 %v818, %v818
        %v823 = vmul.f32 %v819, %v819
        %v824 = vmul.f32 %v820, %v820
        %825 = vadd.xlane.f32.xlu0 %v821
        %v826 = vpop.xlane.xlu0 %825
        %827 = vadd.xlane.f32.xlu0 %v822
        %v828 = vpop.xlane.xlu0 %827
        %829 = vadd.xlane.f32.xlu0 %v823
        %v830 = vpop.xlane.xlu0 %829
        %831 = vadd.xlane.f32.xlu0 %v824
        %v832 = vpop.xlane.xlu0 %831
        %v833 = vmul.f32 %v826, 0.03125
        %v834 = vmul.f32 %v828, 0.03125
        %v835 = vmul.f32 %v830, 0.03125
        %v836 = vmul.f32 %v832, 0.03125
        %v837 = vadd.f32 %v833, 1e-05
        %v838 = vadd.f32 %v834, 1e-05
        %v839 = vadd.f32 %v835, 1e-05
        %v840 = vadd.f32 %v836, 1e-05
        %v841 = vrsqrt.pop %v837
        %v842 = vrsqrt.pop %v838
        %v843 = vrsqrt.pop %v839
        %v844 = vrsqrt.pop %v840
        %v845 = vmul.f32 %v817, %v841
        %v846 = vmul.f32 %v818, %v842
        %v847 = vmul.f32 %v819, %v843
        %v848 = vmul.f32 %v820, %v844
        %v849 = vld [vmem:[%s7] sm:$0x1]
        %v851 = vlaneseq
        %v852 = vshrl.u32 %v851, 7
        %v853 = vsub.s32 0, %v852
        %v854 = vrot.slane %v849, %v853
        %v856 = vmul.f32 %v845, %v854
        %v857 = vmul.f32 %v846, %v854
        %v858 = vmul.f32 %v847, %v854
        %v859 = vmul.f32 %v848, %v854
        %v860 = vld [vmem:[%s8] sm:$0x1]
        %v862 = vlaneseq
        %v863 = vshrl.u32 %v862, 7
        %v864 = vsub.s32 0, %v863
        %v865 = vrot.slane %v860, %v864
        %v867 = vadd.f32 %v856, %v865
        %v868 = vadd.f32 %v857, %v865
        %v869 = vadd.f32 %v858, %v865
        %v870 = vadd.f32 %v859, %v865
        %v871 = vxor.u32 %v867, 2147483648
        %v872 = vxor.u32 %v868, 2147483648
        %v873 = vxor.u32 %v869, 2147483648
        %v874 = vxor.u32 %v870, 2147483648
        %v875 = vmul.f32 %v871, 1.442695
        %v876 = vpow.pop %v875
        %v877 = vmul.f32 %v872, 1.442695
        %v878 = vpow.pop %v877
        %v879 = vmul.f32 %v873, 1.442695
        %v880 = vpow.pop %v879
        %v881 = vmul.f32 %v874, 1.442695
        %v882 = vpow.pop %v881
        %v883 = vadd.f32 %v876, 1.0
        %v884 = vadd.f32 %v878, 1.0
        %v885 = vadd.f32 %v880, 1.0
        %v886 = vadd.f32 %v882, 1.0
        %v887 = vrcp.pop %v883
        %v888 = vmul.f32 1.0, %v887
        %v889 = vrcp.pop %v884
        %v890 = vmul.f32 1.0, %v889
        %v891 = vrcp.pop %v885
        %v892 = vmul.f32 1.0, %v891
        %v893 = vrcp.pop %v886
        %v894 = vmul.f32 1.0, %v893
        %v895 = vmul.f32 %v867, %v888
        %v896 = vmul.f32 %v868, %v890
        %v897 = vmul.f32 %v869, %v892
        %v898 = vmul.f32 %v870, %v894
        %v899 = vld [vmem:[#allocation8] sm:$0xf]
        %v900 = vld [vmem:[#allocation8 + $0x4] sm:$0xf]
        %v901 = vld [vmem:[#allocation8 + $0x8] sm:$0xf]
        %v902 = vld [vmem:[#allocation8 + $0xc] sm:$0xf]
        %v903 = vld [vmem:[#allocation8 + $0x10] sm:$0xf]
        %v904 = vld [vmem:[#allocation8 + $0x14] sm:$0xf]
        %v905 = vld [vmem:[#allocation8 + $0x18] sm:$0xf]
        %v906 = vld [vmem:[#allocation8 + $0x1c] sm:$0xf]
        %v907 = vld [vmem:[#allocation8 + $0x20] sm:$0xf]
        %v908 = vld [vmem:[#allocation8 + $0x24] sm:$0xf]
        %v909 = vld [vmem:[#allocation8 + $0x28] sm:$0xf]
        %v910 = vld [vmem:[#allocation8 + $0x2c] sm:$0xf]
        %v911 = vld [vmem:[#allocation8 + $0x30] sm:$0xf]
        %v912 = vld [vmem:[#allocation8 + $0x34] sm:$0xf]
        %v913 = vld [vmem:[#allocation8 + $0x38] sm:$0xf]
        %v914 = vld [vmem:[#allocation8 + $0x3c] sm:$0xf]
        %v915 = vpack.c.bf16 %v896, %v895
        %v916 = vpack.c.bf16 %v898, %v897
        %v917 = vld [vmem:[%s10] sm:$0x1]
        %v919 = vlaneseq
        %v920 = vshrl.u32 %v919, 7
        %v921 = vsub.s32 0, %v920
        %v922 = vrot.slane %v917, %v921
        %v940 = vunpack.c.l.b16 %v899
        %v941 = vunpack.c.l.b16 %v900
        %v942 = vunpack.c.l.b16 %v901
        %v943 = vunpack.c.l.b16 %v902
        %v944 = vunpack.c.l.b16 %v903
        %v945 = vunpack.c.l.b16 %v904
        %v946 = vunpack.c.l.b16 %v905
        %v947 = vunpack.c.l.b16 %v906
        %v948 = vunpack.c.l.b16 %v907
        %v949 = vunpack.c.l.b16 %v908
        %v950 = vunpack.c.l.b16 %v909
        %v951 = vunpack.c.l.b16 %v910
        %v952 = vunpack.c.l.b16 %v911
        %v953 = vunpack.c.l.b16 %v912
        %v954 = vunpack.c.l.b16 %v913
        %v955 = vunpack.c.l.b16 %v914
        %v956 = vpack.c.b16 %v941, %v940
        %v957 = vpack.c.b16 %v943, %v942
        %v958 = vpack.c.b16 %v945, %v944
        %v959 = vpack.c.b16 %v947, %v946
        %v960 = vpack.c.b16 %v949, %v948
        %v961 = vpack.c.b16 %v951, %v950
        %v962 = vpack.c.b16 %v953, %v952
        %v963 = vpack.c.b16 %v955, %v954
        %972 = vmatprep.subr.bf16.mxu0 0
        %973 = vmatpush1.bf16.msra.mxu0 %v963
        %974 = vmatprep.subr.bf16.mxu0 0
        %975 = vmatpush1.bf16.msra.mxu0 %v962
        %976 = vmatprep.subr.bf16.mxu0 0
        %977 = vmatpush1.bf16.msra.mxu0 %v961
        %978 = vmatprep.subr.bf16.mxu0 0
        %979 = vmatpush1.bf16.msra.mxu0 %v960
        %980 = vmatprep.subr.bf16.mxu0 0
        %981 = vmatpush1.bf16.msra.mxu0 %v959
        %982 = vmatprep.subr.bf16.mxu0 0
        %983 = vmatpush1.bf16.msra.mxu0 %v958
        %984 = vmatprep.subr.bf16.mxu0 0
        %985 = vmatpush1.bf16.msra.mxu0 %v957
        %986 = vmatprep.subr.bf16.mxu0 0
        %987 = vmatpush1.bf16.msra.mxu0 %v956
        %988 = vmatprep.subr.bf16.mxu0 0
        %989 = vmatpush2.bf16.msra.mxu0 0
        %990 = vmatprep.subr.bf16.mxu0 0
        %991 = vmatpush2.bf16.msra.mxu0 0
        %992 = vmatprep.subr.bf16.mxu0 0
        %993 = vmatpush2.bf16.msra.mxu0 0
        %994 = vmatprep.subr.bf16.mxu0 0
        %995 = vmatpush2.bf16.msra.mxu0 0
        %996 = vmatprep.subr.bf16.mxu0 0
        %997 = vmatpush2.bf16.msra.mxu0 0
        %998 = vmatprep.subr.bf16.mxu0 0
        %999 = vmatpush2.bf16.msra.mxu0 0
        %1000 = vmatprep.subr.bf16.mxu0 0
        %1001 = vmatpush2.bf16.msra.mxu0 0
        %1002 = vmatprep.subr.bf16.mxu0 0
        %1003 = vmatpush2.bf16.msra.mxu0 0
        %1004 = vmatprep.mubr.bf16.mxu0 0
        %1005 = vmatmul.mubr.bf16.gmra.mxu0 %v915
        %v1006 = vpop.f32.mrf.mxu0
        %v1007 = vadd.f32 %v922, %v1006
        %v1008 = vpop.f32.mrf.mxu0
        %v1009 = vpop.f32.mrf.mxu0
        %v1010 = vadd.f32 %v922, %v1009
        %v1011 = vpop.f32.mrf.mxu0
        %1012 = vmatprep.mubr.bf16.mxu0 0
        %1013 = vmatmul.mubr.bf16.gmra.mxu0 %v916
        %v1014 = vpop.f32.mrf.mxu0
        %v1015 = vadd.f32 %v922, %v1014
        %v1016 = vpop.f32.mrf.mxu0
        %v1017 = vpop.f32.mrf.mxu0
        %v1018 = vadd.f32 %v922, %v1017
        %v1019 = vpop.f32.mrf.mxu0
        %1020 = vdwg.mxu0
        %1021 = vst [vmem:[%s448] sm:$0xff] %v1007
        %1022 = vst [vmem:[%s448 + $0x8] sm:$0xff] %v1010
        %1023 = vst [vmem:[%s448 + $0x10] sm:$0xff] %v1015
        %1024 = vst [vmem:[%s448 + $0x18] sm:$0xff] %v1018
        %s1025 = sand.u32 %s274, 1
        %s1026 = scalar_lea.sflag [#allocation4], %s1025
        %s1027 = sand.u32 %s274, 1
        %s1028 = smul.addr %s1027, 32
        %s1029 = scalar_lea.vmem [#allocation10], %s1028
        // Predicated region
        $region81: #{tpu_custom_call.1} parent=63 // pred_check
          %p1030 = pneg %p284
        $region82: #{tpu_custom_call.1} parent=63 // pred_check_branch
          %1032 = sbr.rel (%p1030) target = $region84
        $region83: #{tpu_custom_call.1} parent=63 // pred_region
          %s1033 = smul.u32 4, %s30
          %s1035 = ssub.s32 512, 512
          %1036 = vsyncadd %s1026, %s1035
          %s1037 = smul.addr %s1033, 128
          %s1038 = scalar_lea.hbm %s11, %s1037
          %s1039 = sshll.u32 %s1029, 4
          %s1040 = int_to_ptr.vmem [resolvable:$true] %s1039
          %1045 = dma.vmem_to_hbm [thread:$0]  %s1040, 512, %s1038, %s1026, 128, 128, 8
        $region84: #{tpu_custom_call.1} parent=63 // pred_fallthru
          _
      $region64: #{tpu_custom_call.1} parent=5 // pred_fallthru
        _
      %p1046 = scmp.le.s32.totalorder 2, %s25
      // Predicated region
      $region85: #{tpu_custom_call.1} parent=5 // pred_check
        %p1047 = pneg %p1046
      $region86: #{tpu_custom_call.1} parent=5 // pred_check_branch
        %1049 = sbr.rel (%p1047) target = $region88
      $region87: #{tpu_custom_call.1} parent=5 // pred_region
        %s1050 = ssub.s32 %s25, 2
        // Predicated region
        $region89: #{tpu_custom_call.1} parent=87 // pred_check
          %p1051 = pneg %p290
        $region90: #{tpu_custom_call.1} parent=87 // pred_check_branch
          %1053 = sbr.rel (%p1051) target = $region92
        $region91: #{tpu_custom_call.1} parent=87 // pred_region
          %s1054 = sand.u32 %s275, 1
          %s1055 = scalar_lea.sflag [#allocation4], %s1054
          %s1056 = sand.u32 %s275, 1
          %s1057 = smul.addr %s1056, 32
          %s1058 = scalar_lea.vmem [#allocation10], %s1057
          %1059 = dma.done %s1055, 512
        $region92: #{tpu_custom_call.1} parent=87 // pred_fallthru
          _
      $region88: #{tpu_custom_call.1} parent=5 // pred_fallthru
        _
    $region6: #{tpu_custom_call.1} parent=1 // loop_footer
      %s29 = sadd.s32 1, %s25
    $region7: #{tpu_custom_call.1} parent=1 // loop_footer_branch
      %24 = sbr.rel target = $region3
    $region8: #{tpu_custom_call.1} parent=1 // loop_exit
      _
    %1060 = vsyncpa [#allocation3], 1
    %s1061 = scalar_lea.sflag [#allocation3], 1
    %1062 = vsyncpa %s1061, 1
    %1063 = vsyncpa [#allocation6], 1
    %1064 = vsyncpa [#allocation9], 1
    %1065 = vsyncpa [#allocation4], 1
    %s1066 = scalar_lea.sflag [#allocation4], 1
    %1067 = vsyncpa %s1066, 1

</llo_original>
